<compile_context>
chip_gen: v7x
topology: tpu7x:2x2x1
jax: 0.10.0
libtpu: 0.0.40
codegen_flags: <defaults>
</compile_context>

<pallas_src>
import math

import jax
import jax.numpy as jnp
from jax.experimental import pallas as pl
from jax.experimental.pallas import tpu as pltpu

# ---------------------------- fixed trial config ----------------------------

N_CHEM_NODE_FEAT = 32
N_PROT_NODE_FEAT = 32
GCN_OUTS = (64, 128)            # per-branch GCNConv widths
POST_FC_OUT = 256               # per-branch graph post-FC width
FINAL_FC_OUTS = (256, 256)      # final FC stack widths
OUT_LANE_PAD = 128              # lane padding of the 256->1 output head
ROW_PAD = 8                     # pad batch rows to a full sublane group

# stacked (chem||prot block-diagonal) widths
STACK_IN = N_CHEM_NODE_FEAT + N_PROT_NODE_FEAT      # 64
STACK_G0 = 2 * GCN_OUTS[0]                          # 128
STACK_G1 = 2 * GCN_OUTS[1]                          # 256
STACK_POST = 2 * POST_FC_OUT                        # 512


# ------------------------------ fused kernel --------------------------------


def _fused_dti_kernel(
    a_ref,        # (N, N)        f32  block-diag normalized adjacency
    x_ref,        # (N, 64)       bf16 stacked node features
    p_ref,        # (B_pad, N)    f32  mean-pool matrix (chem+prot combined)
    gcn_b_ref,    # (N, 384)      f32  per-node biases: [:,:128]=L0, [:,128:]=L1
    w0_ref,       # (64, 128)     bf16 blockdiag(wc0, wp0)
    w1_ref,       # (128, 256)    bf16 blockdiag(wc1, wp1)
    wpost_ref,    # (256, 512)    bf16 blockdiag(wcp, wpp)
    wf1_ref,      # (512, 256)    bf16 final FC1 (unsplit, == concat semantics)
    wf2_ref,      # (256, 256)    bf16 final FC2
    wo_ref,       # (256, 128)    bf16 output head, zero-padded lanes 1:128
    fc_b_ref,     # (4, 512)      f32  rows: post / fc1 / fc2 / out biases
    o_ref,        # (B_pad, 128)  f32  output slab (col 0 = prediction)
):
    f32 = jnp.float32
    bf16 = jnp.bfloat16

    # --- GCN layer 0 (both branches, block-diagonal) ---
    xw = jnp.dot(x_ref[...], w0_ref[...], preferred_element_type=f32)
    h = jnp.dot(a_ref[...], xw, preferred_element_type=f32)      # f32 aggregation
    h = jnp.maximum(h + gcn_b_ref[:, :STACK_G0], 0.0)

    # --- GCN layer 1 ---
    xw = jnp.dot(h.astype(bf16), w1_ref[...], preferred_element_type=f32)
    h = jnp.dot(a_ref[...], xw, preferred_element_type=f32)
    h = jnp.maximum(h + gcn_b_ref[:, STACK_G0:STACK_G0 + STACK_G1], 0.0)

    # --- global mean pool (both branches at once): (B,N)@(N,256) ---
    pooled = jnp.dot(p_ref[...], h, preferred_element_type=f32)

    # --- per-branch post-FC (block-diagonal): ReLU((B,256)@(256,512)+b) ---
    # Result columns 0:256 == chem_out, 256:512 == prot_out  (== torch.cat).
    h = jnp.dot(pooled.astype(bf16), wpost_ref[...], preferred_element_type=f32)
    h = jnp.maximum(h + fc_b_ref[0:1, :], 0.0)

    # --- final FC1 (K=512, single dot — concat-free) ---
    h = jnp.dot(h.astype(bf16), wf1_ref[...], preferred_element_type=f32)
    h = jnp.maximum(h + fc_b_ref[1:2, :FINAL_FC_OUTS[0]], 0.0)

    # --- final FC2 ---
    h = jnp.dot(h.astype(bf16), wf2_ref[...], preferred_element_type=f32)
    h = jnp.maximum(h + fc_b_ref[2:3, :FINAL_FC_OUTS[1]], 0.0)

    # --- output head (lane-padded -> full unmasked vreg store) ---
    out = jnp.dot(h.astype(bf16), wo_ref[...], preferred_element_type=f32)
    out = out + fc_b_ref[3:4, :OUT_LANE_PAD]
    o_ref[...] = out.astype(o_ref.dtype)


def _vmem_spec():
    # Gridless call: whole array resident in VMEM, no pipelined block machinery.
    return pl.BlockSpec(memory_space=pltpu.MemorySpace.VMEM)


@jax.jit
def dti_forward(a, x, p, gcn_b, w0, w1, wpost, wf1, wf2, wo, fc_b):
    """Fused forward.  Returns (ROW_PAD, OUT_LANE_PAD) f32 slab; real
    predictions live in [:num_graphs, :1]."""
    b_pad = p.shape[0]
    return pl.pallas_call(
        _fused_dti_kernel,
        out_shape=jax.ShapeDtypeStruct((b_pad, OUT_LANE_PAD), jnp.float32),
        in_specs=[_vmem_spec() for _ in range(11)],
        out_specs=_vmem_spec(),
    )(a, x, p, gcn_b, w0, w1, wpost, wf1, wf2, wo, fc_b)


# ------------------- plain-JAX glue (run ONCE, off hot path) -----------------


def _block_diag(a, b):
    n1, m1 = a.shape
    n2, m2 = b.shape
    out = jnp.zeros((n1 + n2, m1 + m2), a.dtype)
    out = out.at[:n1, :m1].set(a)
    out = out.at[n1:, m1:].set(b)
    return out


def build_gcn_adjacency(edge_index, num_nodes):
    """Dense A_hat = D^{-1/2}(A + I)D^{-1/2} from a [2, E] edge_index (f32)."""
    src, dst = edge_index[0], edge_index[1]
    adj = jnp.zeros((num_nodes, num_nodes), jnp.float32)
    # NOTE: .set (not .add) dedups multi-edges — matches PyG GCNConv when
    # edge_index has no duplicates and no edge_weight.
    adj = adj.at[src, dst].set(1.0)
    adj = adj + jnp.eye(num_nodes, dtype=jnp.float32)
    deg = jnp.sum(adj, axis=1)
    d_inv_sqrt = jax.lax.rsqrt(jnp.maximum(deg, 1e-12))
    return adj * d_inv_sqrt[:, None] * d_inv_sqrt[None, :]


def build_mean_pool_matrix(batch, num_rows_padded):
    """[B_pad, N] P so P @ H == global_mean_pool(H, batch); zero pad rows."""
    one_hot = (batch[None, :] == jnp.arange(num_rows_padded)[:, None])
    one_hot = one_hot.astype(jnp.float32)
    counts = jnp.maximum(jnp.sum(one_hot, axis=1, keepdims=True), 1.0)
    return one_hot / counts


def _init_linear(key, fan_in, fan_out):
    kw, kb = jax.random.split(key)
    bound = 1.0 / math.sqrt(fan_in)
    w = jax.random.uniform(kw, (fan_in, fan_out), jnp.float32, -bound, bound)
    b = jax.random.uniform(kb, (1, fan_out), jnp.float32, -bound, bound)
    return w, b


def build_packed_params(key, n_chem_nodes, n_prot_nodes):
    """Per-branch f32 params -> block-diagonally stacked, bf16-cast, packed."""
    bf16 = jnp.bfloat16
    keys = jax.random.split(key, 9)
    wc0, bc0 = _init_linear(keys[0], N_CHEM_NODE_FEAT, GCN_OUTS[0])
    wc1, bc1 = _init_linear(keys[1], GCN_OUTS[0], GCN_OUTS[1])
    wcp, bcp = _init_linear(keys[2], GCN_OUTS[1], POST_FC_OUT)
    wp0, bp0 = _init_linear(keys[3], N_PROT_NODE_FEAT, GCN_OUTS[0])
    wp1, bp1 = _init_linear(keys[4], GCN_OUTS[0], GCN_OUTS[1])
    wpp, bpp = _init_linear(keys[5], GCN_OUTS[1], POST_FC_OUT)
    wf1, bf1 = _init_linear(keys[6], 2 * POST_FC_OUT, FINAL_FC_OUTS[0])
    wf2, bf2 = _init_linear(keys[7], FINAL_FC_OUTS[0], FINAL_FC_OUTS[1])
    wo, bo = _init_linear(keys[8], FINAL_FC_OUTS[1], 1)

    n_total = n_chem_nodes + n_prot_nodes

    # Stacked bf16 weights (cast ONCE, at build time).
    w0 = _block_diag(wc0, wp0).astype(bf16)
    w1 = _block_diag(wc1, wp1).astype(bf16)
    wpost = _block_diag(wcp, wpp).astype(bf16)
    wf1_b = wf1.astype(bf16)
    wf2_b = wf2.astype(bf16)
    wo_pad = jnp.zeros((FINAL_FC_OUTS[1], OUT_LANE_PAD), jnp.float32)
    wo_pad = wo_pad.at[:, :1].set(wo).astype(bf16)

    # Per-node GCN bias slab: chem rows get chem bias columns only, prot rows
    # get prot bias columns only (keeps the cross-branch blocks exactly zero).
    gcn_b = jnp.zeros((n_total, STACK_G0 + STACK_G1), jnp.float32)
    gcn_b = gcn_b.at[:n_chem_nodes, :GCN_OUTS[0]].set(bc0)
    gcn_b = gcn_b.at[n_chem_nodes:, GCN_OUTS[0]:STACK_G0].set(bp0)
    gcn_b = gcn_b.at[:n_chem_nodes, STACK_G0:STACK_G0 + GCN_OUTS[1]].set(bc1)
    gcn_b = gcn_b.at[n_chem_nodes:, STACK_G0 + GCN_OUTS[1]:].set(bp1)

    # FC bias slab: row 0 = [bcp|bpp], row 1 = bf1, row 2 = bf2, row 3 = bo.
    fc_b = jnp.zeros((4, STACK_POST), jnp.float32)
    fc_b = fc_b.at[0, :POST_FC_OUT].set(bcp[0])
    fc_b = fc_b.at[0, POST_FC_OUT:].set(bpp[0])
    fc_b = fc_b.at[1, :FINAL_FC_OUTS[0]].set(bf1[0])
    fc_b = fc_b.at[2, :FINAL_FC_OUTS[1]].set(bf2[0])
    fc_b = fc_b.at[3, 0].set(bo[0, 0])

    packed = dict(w0=w0, w1=w1, wpost=wpost, wf1=wf1_b, wf2=wf2_b, wo=wo_pad,
                  gcn_b=gcn_b, fc_b=fc_b)

    def rt(w):  # bf16 round-trip so the reference uses the same weight values
        return w.astype(bf16).astype(jnp.float32)

    raw = dict(wc0=rt(wc0), bc0=bc0, wc1=rt(wc1), bc1=bc1, wcp=rt(wcp), bcp=bcp,
               wp0=rt(wp0), bp0=bp0, wp1=rt(wp1), bp1=bp1, wpp=rt(wpp), bpp=bpp,
               wf1=rt(wf1), bf1=bf1, wf2=rt(wf2), bf2=bf2, wo=rt(wo), bo=bo)
    return packed, raw


def reference_forward(raw, a_chem, x_chem, batch_chem,
                      a_prot, x_prot, batch_prot, num_graphs):
    """Pure-JAX f32 reference of the original (un-stacked) module forward."""
    def pool(h, batch):
        one_hot = (batch[None, :] == jnp.arange(num_graphs)[:, None])
        one_hot = one_hot.astype(jnp.float32)
        return (one_hot @ h) / jnp.sum(one_hot, axis=1, keepdims=True)

    def branch(a, x, batch, w0, b0, w1, b1, wp, bp):
        h = jnp.maximum(a @ (x @ w0) + b0, 0.0)
        h = jnp.maximum(a @ (h @ w1) + b1, 0.0)
        return jnp.maximum(pool(h, batch) @ wp + bp, 0.0)

    chem = branch(a_chem, x_chem, batch_chem,
                  raw["wc0"], raw["bc0"], raw["wc1"], raw["bc1"],
                  raw["wcp"], raw["bcp"])
    prot = branch(a_prot, x_prot, batch_prot,
                  raw["wp0"], raw["bp0"], raw["wp1"], raw["bp1"],
                  raw["wpp"], raw["bpp"])
    h = jnp.concatenate([chem, prot], axis=1)
    h = jnp.maximum(h @ raw["wf1"] + raw["bf1"], 0.0)
    h = jnp.maximum(h @ raw["wf2"] + raw["bf2"], 0.0)
    return h @ raw["wo"] + raw["bo"]


def _ring_edge_index(num_graphs, nodes_per_graph):
    """Bidirectional ring inside each graph of a batched node set."""
    src, dst = [], []
    for g in range(num_graphs):
        base = g * nodes_per_graph
        for i in range(nodes_per_graph):
            j = (i + 1) % nodes_per_graph
            src += [base + i, base + j]
            dst += [base + j, base + i]
    return jnp.array([src, dst], dtype=jnp.int32)


# ----------------------------------- main -----------------------------------

if __name__ == "__main__":
    key = jax.random.PRNGKey(0)
    k_params, k_chem_x, k_prot_x = jax.random.split(key, 3)

    # Small synthetic batch: 2 (chem graph, prot graph) pairs.
    B = 2
    CHEM_NODES_PER_GRAPH = 8
    PROT_NODES_PER_GRAPH = 12
    Nc = B * CHEM_NODES_PER_GRAPH           # 16
    Np = B * PROT_NODES_PER_GRAPH           # 24
    N_total = Nc + Np                       # 40 (multiple of 8)

    x_chem = jax.random.normal(k_chem_x, (Nc, N_CHEM_NODE_FEAT), jnp.float32)
    x_prot = jax.random.normal(k_prot_x, (Np, N_PROT_NODE_FEAT), jnp.float32)
    batch_chem = jnp.repeat(jnp.arange(B, dtype=jnp.int32), CHEM_NODES_PER_GRAPH)
    batch_prot = jnp.repeat(jnp.arange(B, dtype=jnp.int32), PROT_NODES_PER_GRAPH)

    # --- graph-structure preprocessing: ONCE per structure, off the hot path ---
    a_chem = build_gcn_adjacency(_ring_edge_index(B, CHEM_NODES_PER_GRAPH), Nc)
    a_prot = build_gcn_adjacency(_ring_edge_index(B, PROT_NODES_PER_GRAPH), Np)
    a_block = _block_diag(a_chem, a_prot)                       # (N, N) f32

    x_block = jnp.zeros((N_total, STACK_IN), jnp.float32)
    x_block = x_block.at[:Nc, :N_CHEM_NODE_FEAT].set(x_chem)
    x_block = x_block.at[Nc:, N_CHEM_NODE_FEAT:].set(x_prot)
    x_block = x_block.astype(jnp.bfloat16)                      # cast once

    p_block = jnp.concatenate(
        [build_mean_pool_matrix(batch_chem, ROW_PAD),
         build_mean_pool_matrix(batch_prot, ROW_PAD)], axis=1)  # (8, N) f32

    packed, raw = build_packed_params(k_params, Nc, Np)

    out_pad = dti_forward(
        a_block, x_block, p_block, packed["gcn_b"],
        packed["w0"], packed["w1"], packed["wpost"],
        packed["wf1"], packed["wf2"], packed["wo"], packed["fc_b"])
    out_pad = jax.block_until_ready(out_pad)
    out = out_pad[:B, :1]                                       # strip padding
    assert out.shape == (B, 1), out.shape

    # Correctness check vs. a pure-JAX f32 reference of the original module.
    x_chem_q = x_chem.astype(jnp.bfloat16).astype(jnp.float32)
    x_prot_q = x_prot.astype(jnp.bfloat16).astype(jnp.float32)
    ref = reference_forward(raw, a_chem, x_chem_q, batch_chem,
                            a_prot, x_prot_q, batch_prot, B)
    assert jnp.all(jnp.isfinite(out)), out
    assert jnp.allclose(out, ref, rtol=1e-1, atol=1e-1), (out, ref)

    print("KERNEL_OK")
</pallas_src>

<mosaic_0001>
module attributes {stable_mosaic.version = 11 : i64} {
  func.func @_fused_dti_kernel(%arg0: memref<40x40xf32, #tpu.memory_space<vmem>>, %arg1: memref<40x64xbf16, #tpu.memory_space<vmem>>, %arg2: memref<8x40xf32, #tpu.memory_space<vmem>>, %arg3: memref<40x384xf32, #tpu.memory_space<vmem>>, %arg4: memref<64x128xbf16, #tpu.memory_space<vmem>>, %arg5: memref<128x256xbf16, #tpu.memory_space<vmem>>, %arg6: memref<256x512xbf16, #tpu.memory_space<vmem>>, %arg7: memref<512x256xbf16, #tpu.memory_space<vmem>>, %arg8: memref<256x256xbf16, #tpu.memory_space<vmem>>, %arg9: memref<256x128xbf16, #tpu.memory_space<vmem>>, %arg10: memref<4x512xf32, #tpu.memory_space<vmem>>, %arg11: memref<8x128xf32, #tpu.memory_space<vmem>>) attributes {dimension_semantics = [], scalar_prefetch = 0 : i64, scratch_operands = 0 : i64, tpu.core_type = #tpu.core_type<tc>} {
    %c0 = arith.constant 0 : index
    %c0_0 = arith.constant 0 : index
    %0 = vector.load %arg1[%c0, %c0_0] : memref<40x64xbf16, #tpu.memory_space<vmem>>, vector<40x64xbf16>
    %c0_1 = arith.constant 0 : index
    %c0_2 = arith.constant 0 : index
    %1 = vector.load %arg4[%c0_1, %c0_2] : memref<64x128xbf16, #tpu.memory_space<vmem>>, vector<64x128xbf16>
    %cst = arith.constant dense<0.000000e+00> : vector<40x128xf32>
    %2 = tpu.matmul %0, %1, %cst {dimension_numbers = #tpu.dot_dimension_numbers<[1], [0], [0], [1], [0, 0, 1, 1], [], []>} : vector<40x64xbf16>, vector<64x128xbf16>, vector<40x128xf32> -> vector<40x128xf32>
    %c0_3 = arith.constant 0 : index
    %c0_4 = arith.constant 0 : index
    %3 = vector.load %arg0[%c0_3, %c0_4] : memref<40x40xf32, #tpu.memory_space<vmem>>, vector<40x40xf32>
    %cst_5 = arith.constant dense<0.000000e+00> : vector<40x128xf32>
    %4 = tpu.matmul %3, %2, %cst_5 {dimension_numbers = #tpu.dot_dimension_numbers<[1], [0], [0], [1], [0, 0, 1, 1], [], []>} : vector<40x40xf32>, vector<40x128xf32>, vector<40x128xf32> -> vector<40x128xf32>
    %c0_6 = arith.constant 0 : index
    %c0_7 = arith.constant 0 : index
    %5 = vector.load %arg3[%c0_6, %c0_7] : memref<40x384xf32, #tpu.memory_space<vmem>>, vector<40x128xf32>
    %6 = arith.addf %4, %5 : vector<40x128xf32>
    %cst_8 = arith.constant 0.000000e+00 : f32
    %7 = vector.broadcast %cst_8 : f32 to vector<40x128xf32>
    %8 = arith.maximumf %6, %7 : vector<40x128xf32>
    %9 = arith.truncf %8 : vector<40x128xf32> to vector<40x128xbf16>
    %c0_9 = arith.constant 0 : index
    %c0_10 = arith.constant 0 : index
    %10 = vector.load %arg5[%c0_9, %c0_10] : memref<128x256xbf16, #tpu.memory_space<vmem>>, vector<128x256xbf16>
    %cst_11 = arith.constant dense<0.000000e+00> : vector<40x256xf32>
    %11 = tpu.matmul %9, %10, %cst_11 {dimension_numbers = #tpu.dot_dimension_numbers<[1], [0], [0], [1], [0, 0, 1, 1], [], []>} : vector<40x128xbf16>, vector<128x256xbf16>, vector<40x256xf32> -> vector<40x256xf32>
    %c0_12 = arith.constant 0 : index
    %c0_13 = arith.constant 0 : index
    %12 = vector.load %arg0[%c0_12, %c0_13] : memref<40x40xf32, #tpu.memory_space<vmem>>, vector<40x40xf32>
    %cst_14 = arith.constant dense<0.000000e+00> : vector<40x256xf32>
    %13 = tpu.matmul %12, %11, %cst_14 {dimension_numbers = #tpu.dot_dimension_numbers<[1], [0], [0], [1], [0, 0, 1, 1], [], []>} : vector<40x40xf32>, vector<40x256xf32>, vector<40x256xf32> -> vector<40x256xf32>
    %c0_15 = arith.constant 0 : index
    %c128 = arith.constant 128 : index
    %14 = vector.load %arg3[%c0_15, %c128] : memref<40x384xf32, #tpu.memory_space<vmem>>, vector<40x256xf32>
    %15 = arith.addf %13, %14 : vector<40x256xf32>
    %cst_16 = arith.constant 0.000000e+00 : f32
    %16 = vector.broadcast %cst_16 : f32 to vector<40x256xf32>
    %17 = arith.maximumf %15, %16 : vector<40x256xf32>
    %c0_17 = arith.constant 0 : index
    %c0_18 = arith.constant 0 : index
    %18 = vector.load %arg2[%c0_17, %c0_18] : memref<8x40xf32, #tpu.memory_space<vmem>>, vector<8x40xf32>
    %cst_19 = arith.constant dense<0.000000e+00> : vector<8x256xf32>
    %19 = tpu.matmul %18, %17, %cst_19 {dimension_numbers = #tpu.dot_dimension_numbers<[1], [0], [0], [1], [0, 0, 1, 1], [], []>} : vector<8x40xf32>, vector<40x256xf32>, vector<8x256xf32> -> vector<8x256xf32>
    %20 = arith.truncf %19 : vector<8x256xf32> to vector<8x256xbf16>
    %c0_20 = arith.constant 0 : index
    %c0_21 = arith.constant 0 : index
    %21 = vector.load %arg6[%c0_20, %c0_21] : memref<256x512xbf16, #tpu.memory_space<vmem>>, vector<256x512xbf16>
    %cst_22 = arith.constant dense<0.000000e+00> : vector<8x512xf32>
    %22 = tpu.matmul %20, %21, %cst_22 {dimension_numbers = #tpu.dot_dimension_numbers<[1], [0], [0], [1], [0, 0, 1, 1], [], []>} : vector<8x256xbf16>, vector<256x512xbf16>, vector<8x512xf32> -> vector<8x512xf32>
    %c0_23 = arith.constant 0 : index
    %c0_24 = arith.constant 0 : index
    %23 = vector.load %arg10[%c0_23, %c0_24] : memref<4x512xf32, #tpu.memory_space<vmem>>, vector<1x512xf32>
    %24 = vector.broadcast %23 : vector<1x512xf32> to vector<8x512xf32>
    %25 = arith.addf %22, %24 : vector<8x512xf32>
    %cst_25 = arith.constant 0.000000e+00 : f32
    %26 = vector.broadcast %cst_25 : f32 to vector<8x512xf32>
    %27 = arith.maximumf %25, %26 : vector<8x512xf32>
    %28 = arith.truncf %27 : vector<8x512xf32> to vector<8x512xbf16>
    %c0_26 = arith.constant 0 : index
    %c0_27 = arith.constant 0 : index
    %29 = vector.load %arg7[%c0_26, %c0_27] : memref<512x256xbf16, #tpu.memory_space<vmem>>, vector<512x256xbf16>
    %cst_28 = arith.constant dense<0.000000e+00> : vector<8x256xf32>
    %30 = tpu.matmul %28, %29, %cst_28 {dimension_numbers = #tpu.dot_dimension_numbers<[1], [0], [0], [1], [0, 0, 1, 1], [], []>} : vector<8x512xbf16>, vector<512x256xbf16>, vector<8x256xf32> -> vector<8x256xf32>
    %c1 = arith.constant 1 : index
    %c0_29 = arith.constant 0 : index
    %31 = vector.load %arg10[%c1, %c0_29] : memref<4x512xf32, #tpu.memory_space<vmem>>, vector<1x256xf32>
    %32 = vector.broadcast %31 : vector<1x256xf32> to vector<8x256xf32>
    %33 = arith.addf %30, %32 : vector<8x256xf32>
    %cst_30 = arith.constant 0.000000e+00 : f32
    %34 = vector.broadcast %cst_30 : f32 to vector<8x256xf32>
    %35 = arith.maximumf %33, %34 : vector<8x256xf32>
    %36 = arith.truncf %35 : vector<8x256xf32> to vector<8x256xbf16>
    %c0_31 = arith.constant 0 : index
    %c0_32 = arith.constant 0 : index
    %37 = vector.load %arg8[%c0_31, %c0_32] : memref<256x256xbf16, #tpu.memory_space<vmem>>, vector<256x256xbf16>
    %cst_33 = arith.constant dense<0.000000e+00> : vector<8x256xf32>
    %38 = tpu.matmul %36, %37, %cst_33 {dimension_numbers = #tpu.dot_dimension_numbers<[1], [0], [0], [1], [0, 0, 1, 1], [], []>} : vector<8x256xbf16>, vector<256x256xbf16>, vector<8x256xf32> -> vector<8x256xf32>
    %c2 = arith.constant 2 : index
    %c0_34 = arith.constant 0 : index
    %39 = vector.load %arg10[%c2, %c0_34] : memref<4x512xf32, #tpu.memory_space<vmem>>, vector<1x256xf32>
    %40 = vector.broadcast %39 : vector<1x256xf32> to vector<8x256xf32>
    %41 = arith.addf %38, %40 : vector<8x256xf32>
    %cst_35 = arith.constant 0.000000e+00 : f32
    %42 = vector.broadcast %cst_35 : f32 to vector<8x256xf32>
    %43 = arith.maximumf %41, %42 : vector<8x256xf32>
    %44 = arith.truncf %43 : vector<8x256xf32> to vector<8x256xbf16>
    %c0_36 = arith.constant 0 : index
    %c0_37 = arith.constant 0 : index
    %45 = vector.load %arg9[%c0_36, %c0_37] : memref<256x128xbf16, #tpu.memory_space<vmem>>, vector<256x128xbf16>
    %cst_38 = arith.constant dense<0.000000e+00> : vector<8x128xf32>
    %46 = tpu.matmul %44, %45, %cst_38 {dimension_numbers = #tpu.dot_dimension_numbers<[1], [0], [0], [1], [0, 0, 1, 1], [], []>} : vector<8x256xbf16>, vector<256x128xbf16>, vector<8x128xf32> -> vector<8x128xf32>
    %c3 = arith.constant 3 : index
    %c0_39 = arith.constant 0 : index
    %47 = vector.load %arg10[%c3, %c0_39] : memref<4x512xf32, #tpu.memory_space<vmem>>, vector<1x128xf32>
    %48 = vector.broadcast %47 : vector<1x128xf32> to vector<8x128xf32>
    %49 = arith.addf %46, %48 : vector<8x128xf32>
    %c0_40 = arith.constant 0 : index
    %c0_41 = arith.constant 0 : index
    %50 = vector.load %arg11[%c0_40, %c0_41] : memref<8x128xf32, #tpu.memory_space<vmem>>, vector<8x128xf32>
    tpu.vector_store %arg11[%c0_40, %c0_41], %49 {strides = array<i32>} : memref<8x128xf32, #tpu.memory_space<vmem>>, vector<8x128xf32>,
    return
  }
}

</mosaic_0001>

<llo_original>
// kernel: dti_forward.1
$region0: #{dti_forward.1}
  #allocation0 [shape = 'u32[]', space=smem, size = 0x4, offset = 0x4, fixed_abs, tag = 'smem constant byte address 0x4 - core index']
  #allocation1 [shape = 'u32[144,128]{1,0:T(1,128)}', space=vmem, size = 0x12000, scoped, tag = 'internal scratch']
  %s0 = inlined_call_operand.hbm [shape: f32[40,40], index: 0, kind: input, shape index: {}]
  %s1 = inlined_call_operand.hbm [shape: bf16[40,64], index: 1, kind: input, shape index: {}]
  %s2 = inlined_call_operand.hbm [shape: f32[8,40], index: 2, kind: input, shape index: {}]
  %s3 = inlined_call_operand.hbm [shape: f32[40,384], index: 3, kind: input, shape index: {}]
  %s4 = inlined_call_operand.hbm [shape: bf16[64,128], index: 4, kind: input, shape index: {}]
  %s5 = inlined_call_operand.hbm [shape: bf16[128,256], index: 5, kind: input, shape index: {}]
  %s6 = inlined_call_operand.hbm [shape: bf16[256,512], index: 6, kind: input, shape index: {}]
  %s7 = inlined_call_operand.hbm [shape: bf16[512,256], index: 7, kind: input, shape index: {}]
  %s8 = inlined_call_operand.hbm [shape: bf16[256,256], index: 8, kind: input, shape index: {}]
  %s9 = inlined_call_operand.hbm [shape: bf16[256,128], index: 9, kind: input, shape index: {}]
  %s10 = inlined_call_operand.vmem [shape: f32[4,512], index: 10, kind: input, shape index: {}]
  %s11 = inlined_call_operand.hbm [shape: f32[8,128], index: 11, kind: output, shape index: {}]
  %s12 = sld [smem:[#allocation0]]
  $region94: #{dti_forward.1} parent=0
    _
  %s14 = ssub.s32 1, %s12
  %s15 = scalar_select 0, %s14, %s12
  $region1: #{dti_forward.1} parent=0
    #allocation2 [shape = 'u8[20480]{0}', space=vmem, size = 0x5000, scoped, tag = 'input window, operand 0, single buffered']
    #allocation3 [shape = 's32[1]{0}', space=sflag, size = 0x4, scoped, tag = 'scoped memory for dti_forward.1']
    #allocation4 [shape = 's32[1]{0}', space=sflag, size = 0x4, scoped, tag = 'scoped memory for dti_forward.1']
    #allocation5 [shape = 'u8[10240]{0}', space=vmem, size = 0x2800, scoped, tag = 'input window, operand 1, single buffered']
    #allocation6 [shape = 's32[1]{0}', space=sflag, size = 0x4, scoped, tag = 'scoped memory for dti_forward.1']
    #allocation7 [shape = 'u8[4096]{0}', space=vmem, size = 0x1000, scoped, tag = 'input window, operand 2, single buffered']
    #allocation8 [shape = 'u8[61440]{0}', space=vmem, size = 0xf000, scoped, tag = 'input window, operand 3, single buffered']
    #allocation9 [shape = 's32[1]{0}', space=sflag, size = 0x4, scoped, tag = 'scoped memory for dti_forward.1']
    #allocation10 [shape = 'u8[16384]{0}', space=vmem, size = 0x4000, scoped, tag = 'input window, operand 4, single buffered']
    #allocation11 [shape = 'u8[65536]{0}', space=vmem, size = 0x10000, scoped, tag = 'input window, operand 5, single buffered']
    #allocation12 [shape = 's32[1]{0}', space=sflag, size = 0x4, scoped, tag = 'scoped memory for dti_forward.1']
    #allocation13 [shape = 'u8[262144]{0}', space=vmem, size = 0x40000, scoped, tag = 'input window, operand 6, single buffered']
    #allocation14 [shape = 'u8[262144]{0}', space=vmem, size = 0x40000, scoped, tag = 'input window, operand 7, single buffered']
    #allocation15 [shape = 's32[1]{0}', space=sflag, size = 0x4, scoped, tag = 'scoped memory for dti_forward.1']
    #allocation16 [shape = 'u8[131072]{0}', space=vmem, size = 0x20000, scoped, tag = 'input window, operand 8, single buffered']
    #allocation17 [shape = 'u8[65536]{0}', space=vmem, size = 0x10000, scoped, tag = 'input window, operand 9, single buffered']
    #allocation18 [shape = 's32[1]{0}', space=sflag, size = 0x4, scoped, tag = 'scoped memory for dti_forward.1']
    #allocation19 [shape = 'u8[4096]{0}', space=vmem, size = 0x1000, scoped, tag = 'output window, operand 0, single buffered']
    %16 = vsyncpa [#allocation3], 0
    %17 = vsyncpa [#allocation6], 0
    %18 = vsyncpa [#allocation9], 0
    %19 = vsyncpa [#allocation12], 0
    %20 = vsyncpa [#allocation15], 0
    %21 = vsyncpa [#allocation18], 0
    %22 = vsyncpa [#allocation4], 0
    // Predicated region
    $region2: #{dti_forward.1} parent=1 // pred_check
      _
    $region3: #{dti_forward.1} parent=1 // pred_check_branch
      %24 = sbr.rel (0) target = $region5
    $region4: #{dti_forward.1} parent=1 // pred_region
      %s26 = ssub.s32 640, 640
      %27 = vsyncadd [#allocation3], %s26
      %s28 = sshll.u32 [#allocation2], 4
      %s29 = int_to_ptr.vmem [resolvable:$true] %s28
      %34 = dma.hbm_to_vmem [thread:$0]  %s0, 640, %s29, [#allocation3], 128, 128, 8
    $region5: #{dti_forward.1} parent=1 // pred_fallthru
      _
    // Predicated region
    $region6: #{dti_forward.1} parent=1 // pred_check
      _
    $region7: #{dti_forward.1} parent=1 // pred_check_branch
      %36 = sbr.rel (0) target = $region9
    $region8: #{dti_forward.1} parent=1 // pred_region
      %s38 = ssub.s32 320, 320
      %39 = vsyncadd [#allocation6], %s38
      %s40 = sshll.u32 [#allocation5], 4
      %s41 = int_to_ptr.vmem [resolvable:$true] %s40
      %46 = dma.hbm_to_vmem [thread:$0]  %s1, 320, %s41, [#allocation6], 64, 64, 4
    $region9: #{dti_forward.1} parent=1 // pred_fallthru
      _
    // Predicated region
    $region10: #{dti_forward.1} parent=1 // pred_check
      _
    $region11: #{dti_forward.1} parent=1 // pred_check_branch
      %48 = sbr.rel (0) target = $region13
    $region12: #{dti_forward.1} parent=1 // pred_region
      %s50 = ssub.s32 128, 128
      %51 = vsyncadd [#allocation6], %s50
      %s53 = sshll.u32 [#allocation7], 4
      %s54 = int_to_ptr.vmem [resolvable:$true] %s53
      %56 = dma.hbm_to_vmem [thread:$0]  %s2, 128, %s54, [#allocation6]
    $region13: #{dti_forward.1} parent=1 // pred_fallthru
      _
    // Predicated region
    $region14: #{dti_forward.1} parent=1 // pred_check
      _
    $region15: #{dti_forward.1} parent=1 // pred_check_branch
      %58 = sbr.rel (0) target = $region17
    $region16: #{dti_forward.1} parent=1 // pred_region
      %s60 = ssub.s32 1920, 1920
      %61 = vsyncadd [#allocation9], %s60
      %s62 = sshll.u32 [#allocation8], 4
      %s63 = int_to_ptr.vmem [resolvable:$true] %s62
      %68 = dma.hbm_to_vmem [thread:$0]  %s3, 1920, %s63, [#allocation9], 384, 384, 24
    $region17: #{dti_forward.1} parent=1 // pred_fallthru
      _
    // Predicated region
    $region18: #{dti_forward.1} parent=1 // pred_check
      _
    $region19: #{dti_forward.1} parent=1 // pred_check_branch
      %70 = sbr.rel (0) target = $region21
    $region20: #{dti_forward.1} parent=1 // pred_region
      %s72 = ssub.s32 512, 512
      %73 = vsyncadd [#allocation9], %s72
      %s74 = sshll.u32 [#allocation10], 4
      %s75 = int_to_ptr.vmem [resolvable:$true] %s74
      %80 = dma.hbm_to_vmem [thread:$0]  %s4, 512, %s75, [#allocation9], 64, 64, 4
    $region21: #{dti_forward.1} parent=1 // pred_fallthru
      _
    // Predicated region
    $region22: #{dti_forward.1} parent=1 // pred_check
      _
    $region23: #{dti_forward.1} parent=1 // pred_check_branch
      %82 = sbr.rel (0) target = $region25
    $region24: #{dti_forward.1} parent=1 // pred_region
      %s84 = ssub.s32 2048, 2048
      %85 = vsyncadd [#allocation12], %s84
      %s86 = sshll.u32 [#allocation11], 4
      %s87 = int_to_ptr.vmem [resolvable:$true] %s86
      %92 = dma.hbm_to_vmem [thread:$0]  %s5, 2048, %s87, [#allocation12], 128, 128, 8
    $region25: #{dti_forward.1} parent=1 // pred_fallthru
      _
    // Predicated region
    $region26: #{dti_forward.1} parent=1 // pred_check
      _
    $region27: #{dti_forward.1} parent=1 // pred_check_branch
      %94 = sbr.rel (0) target = $region29
    $region28: #{dti_forward.1} parent=1 // pred_region
      %s96 = ssub.s32 8192, 8192
      %97 = vsyncadd [#allocation12], %s96
      %s98 = sshll.u32 [#allocation13], 4
      %s99 = int_to_ptr.vmem [resolvable:$true] %s98
      %104 = dma.hbm_to_vmem [thread:$0]  %s6, 8192, %s99, [#allocation12], 256, 256, 16
    $region29: #{dti_forward.1} parent=1 // pred_fallthru
      _
    // Predicated region
    $region30: #{dti_forward.1} parent=1 // pred_check
      _
    $region31: #{dti_forward.1} parent=1 // pred_check_branch
      %106 = sbr.rel (0) target = $region33
    $region32: #{dti_forward.1} parent=1 // pred_region
      %s108 = ssub.s32 8192, 8192
      %109 = vsyncadd [#allocation15], %s108
      %s110 = sshll.u32 [#allocation14], 4
      %s111 = int_to_ptr.vmem [resolvable:$true] %s110
      %116 = dma.hbm_to_vmem [thread:$0]  %s7, 8192, %s111, [#allocation15], 128, 128, 8
    $region33: #{dti_forward.1} parent=1 // pred_fallthru
      _
    // Predicated region
    $region34: #{dti_forward.1} parent=1 // pred_check
      _
    $region35: #{dti_forward.1} parent=1 // pred_check_branch
      %118 = sbr.rel (0) target = $region37
    $region36: #{dti_forward.1} parent=1 // pred_region
      %s120 = ssub.s32 4096, 4096
      %121 = vsyncadd [#allocation15], %s120
      %s122 = sshll.u32 [#allocation16], 4
      %s123 = int_to_ptr.vmem [resolvable:$true] %s122
      %128 = dma.hbm_to_vmem [thread:$0]  %s8, 4096, %s123, [#allocation15], 128, 128, 8
    $region37: #{dti_forward.1} parent=1 // pred_fallthru
      _
    // Predicated region
    $region38: #{dti_forward.1} parent=1 // pred_check
      _
    $region39: #{dti_forward.1} parent=1 // pred_check_branch
      %130 = sbr.rel (0) target = $region41
    $region40: #{dti_forward.1} parent=1 // pred_region
      %s132 = ssub.s32 2048, 2048
      %133 = vsyncadd [#allocation18], %s132
      %s134 = sshll.u32 [#allocation17], 4
      %s135 = int_to_ptr.vmem [resolvable:$true] %s134
      %140 = dma.hbm_to_vmem [thread:$0]  %s9, 2048, %s135, [#allocation18], 64, 64, 4
    $region41: #{dti_forward.1} parent=1 // pred_fallthru
      _
    // Predicated region
    $region42: #{dti_forward.1} parent=1 // pred_check
      _
    $region43: #{dti_forward.1} parent=1 // pred_check_branch
      %142 = sbr.rel (0) target = $region45
    $region44: #{dti_forward.1} parent=1 // pred_region
      _
    $region45: #{dti_forward.1} parent=1 // pred_fallthru
      _
    // Predicated region
    $region46: #{dti_forward.1} parent=1 // pred_check
      _
    $region47: #{dti_forward.1} parent=1 // pred_check_branch
      %144 = sbr.rel (0) target = $region49
    $region48: #{dti_forward.1} parent=1 // pred_region
      %145 = dma.done [#allocation3], 640
    $region49: #{dti_forward.1} parent=1 // pred_fallthru
      _
    // Predicated region
    $region50: #{dti_forward.1} parent=1 // pred_check
      _
    $region51: #{dti_forward.1} parent=1 // pred_check_branch
      %147 = sbr.rel (0) target = $region53
    $region52: #{dti_forward.1} parent=1 // pred_region
      %148 = dma.done [#allocation6], 320
    $region53: #{dti_forward.1} parent=1 // pred_fallthru
      _
    // Predicated region
    $region54: #{dti_forward.1} parent=1 // pred_check
      _
    $region55: #{dti_forward.1} parent=1 // pred_check_branch
      %150 = sbr.rel (0) target = $region57
    $region56: #{dti_forward.1} parent=1 // pred_region
      %151 = dma.done [#allocation6], 128
    $region57: #{dti_forward.1} parent=1 // pred_fallthru
      _
    // Predicated region
    $region58: #{dti_forward.1} parent=1 // pred_check
      _
    $region59: #{dti_forward.1} parent=1 // pred_check_branch
      %153 = sbr.rel (0) target = $region61
    $region60: #{dti_forward.1} parent=1 // pred_region
      %154 = dma.done [#allocation9], 1920
    $region61: #{dti_forward.1} parent=1 // pred_fallthru
      _
    // Predicated region
    $region62: #{dti_forward.1} parent=1 // pred_check
      _
    $region63: #{dti_forward.1} parent=1 // pred_check_branch
      %156 = sbr.rel (0) target = $region65
    $region64: #{dti_forward.1} parent=1 // pred_region
      %157 = dma.done [#allocation9], 512
    $region65: #{dti_forward.1} parent=1 // pred_fallthru
      _
    // Predicated region
    $region66: #{dti_forward.1} parent=1 // pred_check
      _
    $region67: #{dti_forward.1} parent=1 // pred_check_branch
      %159 = sbr.rel (0) target = $region69
    $region68: #{dti_forward.1} parent=1 // pred_region
      %160 = dma.done [#allocation12], 2048
    $region69: #{dti_forward.1} parent=1 // pred_fallthru
      _
    // Predicated region
    $region70: #{dti_forward.1} parent=1 // pred_check
      _
    $region71: #{dti_forward.1} parent=1 // pred_check_branch
      %162 = sbr.rel (0) target = $region73
    $region72: #{dti_forward.1} parent=1 // pred_region
      %163 = dma.done [#allocation12], 8192
    $region73: #{dti_forward.1} parent=1 // pred_fallthru
      _
    // Predicated region
    $region74: #{dti_forward.1} parent=1 // pred_check
      _
    $region75: #{dti_forward.1} parent=1 // pred_check_branch
      %165 = sbr.rel (0) target = $region77
    $region76: #{dti_forward.1} parent=1 // pred_region
      %166 = dma.done [#allocation15], 8192
    $region77: #{dti_forward.1} parent=1 // pred_fallthru
      _
    // Predicated region
    $region78: #{dti_forward.1} parent=1 // pred_check
      _
    $region79: #{dti_forward.1} parent=1 // pred_check_branch
      %168 = sbr.rel (0) target = $region81
    $region80: #{dti_forward.1} parent=1 // pred_region
      %169 = dma.done [#allocation15], 4096
    $region81: #{dti_forward.1} parent=1 // pred_fallthru
      _
    // Predicated region
    $region82: #{dti_forward.1} parent=1 // pred_check
      _
    $region83: #{dti_forward.1} parent=1 // pred_check_branch
      %171 = sbr.rel (0) target = $region85
    $region84: #{dti_forward.1} parent=1 // pred_region
      %172 = dma.done [#allocation18], 2048
    $region85: #{dti_forward.1} parent=1 // pred_fallthru
      _
    %v174 = vld [vmem:[#allocation5] sm:$0xf]
    %v175 = vld [vmem:[#allocation5 + $0x4] sm:$0xf]
    %v176 = vld [vmem:[#allocation5 + $0x8] sm:$0xf]
    %v177 = vld [vmem:[#allocation5 + $0xc] sm:$0xf]
    %v178 = vld [vmem:[#allocation5 + $0x10] sm:$0xf]
    %v179 = vld [vmem:[#allocation10] sm:$0xf]
    %v180 = vld [vmem:[#allocation10 + $0x4] sm:$0xf]
    %v181 = vld [vmem:[#allocation10 + $0x8] sm:$0xf]
    %v182 = vld [vmem:[#allocation10 + $0xc] sm:$0xf]
    %v183 = vld [vmem:[#allocation10 + $0x10] sm:$0xf]
    %v184 = vld [vmem:[#allocation10 + $0x14] sm:$0xf]
    %v185 = vld [vmem:[#allocation10 + $0x18] sm:$0xf]
    %v186 = vld [vmem:[#allocation10 + $0x1c] sm:$0xf]
    %v192 = vunpack.c.l.b16 %v174
    %v193 = vunpack.c.l.b16 %v175
    %v194 = vunpack.c.l.b16 %v176
    %v195 = vunpack.c.l.b16 %v177
    %v196 = vunpack.c.l.b16 %v178
    %v197 = vpack.c.b16 %v193, %v192
    %v198 = vpack.c.b16 %v195, %v194
    %v199 = vpack.c.b16 %v196, %v196
    %v208 = vunpack.c.l.b16 %v179
    %v209 = vunpack.c.l.b16 %v180
    %v210 = vunpack.c.l.b16 %v181
    %v211 = vunpack.c.l.b16 %v182
    %v212 = vunpack.c.l.b16 %v183
    %v213 = vunpack.c.l.b16 %v184
    %v214 = vunpack.c.l.b16 %v185
    %v215 = vunpack.c.l.b16 %v186
    %v216 = vpack.c.b16 %v209, %v208
    %v217 = vpack.c.b16 %v211, %v210
    %v218 = vpack.c.b16 %v213, %v212
    %v219 = vpack.c.b16 %v215, %v214
    %vm224 = vcmask 523264
    %v226 = vsel %vm224, %v197, 0
    %v229 = vsel %vm224, %v198, 0
    %v232 = vsel %vm224, %v199, 0
    %234 = vmatprep.subr.bf16.mxu0 0
    %235 = vmatpush1.bf16.msra.mxu0 %v216
    %236 = vmatprep.subr.bf16.mxu0 0
    %237 = vmatpush1.bf16.msra.mxu0 %v217
    %238 = vmatprep.subr.bf16.mxu0 0
    %239 = vmatpush1.bf16.msra.mxu0 %v218
    %240 = vmatprep.subr.bf16.mxu0 0
    %241 = vmatpush1.bf16.msra.mxu0 %v219
    %242 = vmatprep.subr.bf16.mxu0 0
    %243 = vmatpush1.bf16.msra.mxu0 0
    %244 = vmatprep.subr.bf16.mxu0 0
    %245 = vmatpush1.bf16.msra.mxu0 0
    %246 = vmatprep.subr.bf16.mxu0 0
    %247 = vmatpush1.bf16.msra.mxu0 0
    %248 = vmatprep.subr.bf16.mxu0 0
    %249 = vmatpush1.bf16.msra.mxu0 0
    %250 = vmatprep.subr.bf16.mxu0 0
    %251 = vmatpush1.bf16.msra.mxu0 0
    %252 = vmatprep.subr.bf16.mxu0 0
    %253 = vmatpush1.bf16.msra.mxu0 0
    %254 = vmatprep.subr.bf16.mxu0 0
    %255 = vmatpush1.bf16.msra.mxu0 0
    %256 = vmatprep.subr.bf16.mxu0 0
    %257 = vmatpush1.bf16.msra.mxu0 0
    %258 = vmatprep.subr.bf16.mxu0 0
    %259 = vmatpush1.bf16.msra.mxu0 0
    %260 = vmatprep.subr.bf16.mxu0 0
    %261 = vmatpush1.bf16.msra.mxu0 0
    %262 = vmatprep.subr.bf16.mxu0 0
    %263 = vmatpush1.bf16.msra.mxu0 0
    %264 = vmatprep.subr.bf16.mxu0 0
    %265 = vmatpush1.bf16.msra.mxu0 0
    %266 = vmatprep.mubr.bf16.mxu0 0
    %267 = vmatmul.mubr.bf16.gmra.mrb[0].mxu0 %v226
    %v268 = vpop.f32.mrb[0].mxu0
    %v269 = vadd.f32 0.0, %v268
    %v270 = vpop.f32.mrb[0].mxu0
    %v271 = vpop.f32.mrb[0].mxu0
    %v272 = vadd.f32 0.0, %v271
    %v273 = vpop.f32.mrb[0].mxu0
    %274 = vmatprep.mubr.bf16.mxu0 0
    %275 = vmatmul.mubr.bf16.gmra.mrb[0].mxu0 %v229
    %v276 = vpop.f32.mrb[0].mxu0
    %v277 = vadd.f32 0.0, %v276
    %v278 = vpop.f32.mrb[0].mxu0
    %v279 = vpop.f32.mrb[0].mxu0
    %v280 = vadd.f32 0.0, %v279
    %v281 = vpop.f32.mrb[0].mxu0
    %282 = vmatprep.mubr.bf16.mxu0 0
    %283 = vmatmul.mubr.bf16.gmra.mrb[0].mxu0 %v232
    %v284 = vpop.f32.mrb[0].mxu0
    %v285 = vadd.f32 0.0, %v284
    %v286 = vpop.f32.mrb[0].mxu0
    %v287 = vpop.f32.mrb[0].mxu0
    %v288 = vpop.f32.mrb[0].mxu0
    %289 = vdwg.mxu0
    %v290 = vld [vmem:[#allocation2] sm:$0xff]
    %v291 = vld [vmem:[#allocation2 + $0x8] sm:$0xff]
    %v292 = vld [vmem:[#allocation2 + $0x10] sm:$0xff]
    %v293 = vld [vmem:[#allocation2 + $0x18] sm:$0xff]
    %v294 = vld [vmem:[#allocation2 + $0x20] sm:$0xff]
    %v295 = vld [vmem:[#allocation8] sm:$0xff]
    %v296 = vld [vmem:[#allocation8 + $0x18] sm:$0xff]
    %v297 = vld [vmem:[#allocation8 + $0x30] sm:$0xff]
    %v298 = vld [vmem:[#allocation8 + $0x48] sm:$0xff]
    %v299 = vld [vmem:[#allocation8 + $0x60] sm:$0xff]
    %vm300 = vcmask 326656
    %v302 = vsel %vm300, %v290, 0
    %v305 = vsel %vm300, %v291, 0
    %v308 = vsel %vm300, %v292, 0
    %v311 = vsel %vm300, %v293, 0
    %v314 = vsel %vm300, %v294, 0
    %316 = vmatprep.subr.mxu0 0.0
    %317 = vmatpush1.msra.mxu0 %v269
    %318 = vmatprep.subr.mxu0 0.0
    %319 = vmatpush1.msra.mxu0 %v272
    %320 = vmatprep.subr.mxu0 0.0
    %321 = vmatpush1.msra.mxu0 %v277
    %322 = vmatprep.subr.mxu0 0.0
    %323 = vmatpush1.msra.mxu0 %v280
    %324 = vmatprep.subr.mxu0 0.0
    %325 = vmatpush1.msra.mxu0 %v285
    %326 = vmatprep.subr.mxu0 0.0
    %327 = vmatpush1.msra.mxu0 0.0
    %328 = vmatprep.subr.mxu0 0.0
    %329 = vmatpush1.msra.mxu0 0.0
    %330 = vmatprep.subr.mxu0 0.0
    %331 = vmatpush1.msra.mxu0 0.0
    %332 = vmatprep.subr.mxu0 0.0
    %333 = vmatpush1.msra.mxu0 0.0
    %334 = vmatprep.subr.mxu0 0.0
    %335 = vmatpush1.msra.mxu0 0.0
    %336 = vmatprep.subr.mxu0 0.0
    %337 = vmatpush1.msra.mxu0 0.0
    %338 = vmatprep.subr.mxu0 0.0
    %339 = vmatpush1.msra.mxu0 0.0
    %340 = vmatprep.subr.mxu0 0.0
    %341 = vmatpush1.msra.mxu0 0.0
    %342 = vmatprep.subr.mxu0 0.0
    %343 = vmatpush1.msra.mxu0 0.0
    %344 = vmatprep.subr.mxu0 0.0
    %345 = vmatpush1.msra.mxu0 0.0
    %346 = vmatprep.subr.mxu0 0.0
    %347 = vmatpush1.msra.mxu0 0.0
    %348 = vmatprep.subr.mxu0 0.0
    %349 = vmatpush1.msra.mxu0 0.0
    %350 = vmatprep.subr.mxu0 0.0
    %351 = vmatpush1.msra.mxu0 0.0
    %352 = vmatprep.subr.mxu0 0.0
    %353 = vmatpush1.msra.mxu0 0.0
    %354 = vmatprep.subr.mxu0 0.0
    %355 = vmatpush1.msra.mxu0 0.0
    %356 = vmatprep.subr.mxu0 0.0
    %357 = vmatpush1.msra.mxu0 0.0
    %358 = vmatprep.subr.mxu0 0.0
    %359 = vmatpush1.msra.mxu0 0.0
    %360 = vmatprep.subr.mxu0 0.0
    %361 = vmatpush1.msra.mxu0 0.0
    %362 = vmatprep.subr.mxu0 0.0
    %363 = vmatpush1.msra.mxu0 0.0
    %364 = vmatprep.subr.mxu0 0.0
    %365 = vmatpush1.msra.mxu0 0.0
    %366 = vmatprep.subr.mxu0 0.0
    %367 = vmatpush1.msra.mxu0 0.0
    %368 = vmatprep.subr.mxu0 0.0
    %369 = vmatpush1.msra.mxu0 0.0
    %370 = vmatprep.subr.mxu0 0.0
    %371 = vmatpush1.msra.mxu0 0.0
    %372 = vmatprep.subr.mxu0 0.0
    %373 = vmatpush1.msra.mxu0 0.0
    %374 = vmatprep.subr.mxu0 0.0
    %375 = vmatpush1.msra.mxu0 0.0
    %376 = vmatprep.subr.mxu0 0.0
    %377 = vmatpush1.msra.mxu0 0.0
    %378 = vmatprep.subr.mxu0 0.0
    %379 = vmatpush1.msra.mxu0 0.0
    %380 = vmatprep.mubr.f32.mxu0 0.0
    %381 = vmatmul.mubr.f32.gmra.mrb[0].mxu0 %v302
    %v382 = vpop.f32.mrb[0].mxu0
    %v383 = vadd.f32 %v295, %v382
    %v384 = vpop.f32.mrb[0].mxu0
    %385 = vmatprep.mubr.f32.mxu0 0.0
    %386 = vmatmul.mubr.f32.gmra.mrb[0].mxu0 %v305
    %v387 = vpop.f32.mrb[0].mxu0
    %v388 = vadd.f32 %v296, %v387
    %v389 = vpop.f32.mrb[0].mxu0
    %390 = vmatprep.mubr.f32.mxu0 0.0
    %391 = vmatmul.mubr.f32.gmra.mrb[0].mxu0 %v308
    %v392 = vpop.f32.mrb[0].mxu0
    %v393 = vadd.f32 %v297, %v392
    %v394 = vpop.f32.mrb[0].mxu0
    %395 = vmatprep.mubr.f32.mxu0 0.0
    %396 = vmatmul.mubr.f32.gmra.mrb[0].mxu0 %v311
    %v397 = vpop.f32.mrb[0].mxu0
    %v398 = vadd.f32 %v298, %v397
    %v399 = vpop.f32.mrb[0].mxu0
    %400 = vmatprep.mubr.f32.mxu0 0.0
    %401 = vmatmul.mubr.f32.gmra.mrb[0].mxu0 %v314
    %v402 = vpop.f32.mrb[0].mxu0
    %v403 = vadd.f32 %v299, %v402
    %v404 = vpop.f32.mrb[0].mxu0
    %405 = vdwg.mxu0
    %v406 = vmax.f32 %v383, 0.0
    %v407 = vmax.f32 %v388, 0.0
    %v408 = vmax.f32 %v393, 0.0
    %v409 = vmax.f32 %v398, 0.0
    %v410 = vmax.f32 %v403, 0.0
    %v411 = vpack.c.bf16 %v407, %v406
    %v412 = vpack.c.bf16 %v409, %v408
    %v413 = vpack.c.bf16 %v410, %v410
    %v414 = vld [vmem:[#allocation11] sm:$0xff]
    %v415 = vld [vmem:[#allocation11 + $0x8] sm:$0xff]
    %v416 = vld [vmem:[#allocation11 + $0x10] sm:$0xff]
    %v417 = vld [vmem:[#allocation11 + $0x18] sm:$0xff]
    %v418 = vld [vmem:[#allocation11 + $0x20] sm:$0xff]
    %v419 = vld [vmem:[#allocation11 + $0x28] sm:$0xff]
    %v420 = vld [vmem:[#allocation11 + $0x30] sm:$0xff]
    %v421 = vld [vmem:[#allocation11 + $0x38] sm:$0xff]
    %v422 = vld [vmem:[#allocation11 + $0x40] sm:$0xff]
    %v423 = vld [vmem:[#allocation11 + $0x48] sm:$0xff]
    %v424 = vld [vmem:[#allocation11 + $0x50] sm:$0xff]
    %v425 = vld [vmem:[#allocation11 + $0x58] sm:$0xff]
    %v426 = vld [vmem:[#allocation11 + $0x60] sm:$0xff]
    %v427 = vld [vmem:[#allocation11 + $0x68] sm:$0xff]
    %v428 = vld [vmem:[#allocation11 + $0x70] sm:$0xff]
    %v429 = vld [vmem:[#allocation11 + $0x78] sm:$0xff]
    %v446 = vunpack.c.l.b16 %v414
    %v447 = vunpack.c.h.b16 %v414
    %v448 = vunpack.c.l.b16 %v415
    %v449 = vunpack.c.h.b16 %v415
    %v450 = vunpack.c.l.b16 %v416
    %v451 = vunpack.c.h.b16 %v416
    %v452 = vunpack.c.l.b16 %v417
    %v453 = vunpack.c.h.b16 %v417
    %v454 = vunpack.c.l.b16 %v418
    %v455 = vunpack.c.h.b16 %v418
    %v456 = vunpack.c.l.b16 %v419
    %v457 = vunpack.c.h.b16 %v419
    %v458 = vunpack.c.l.b16 %v420
    %v459 = vunpack.c.h.b16 %v420
    %v460 = vunpack.c.l.b16 %v421
    %v461 = vunpack.c.h.b16 %v421
    %v462 = vunpack.c.l.b16 %v422
    %v463 = vunpack.c.h.b16 %v422
    %v464 = vunpack.c.l.b16 %v423
    %v465 = vunpack.c.h.b16 %v423
    %v466 = vunpack.c.l.b16 %v424
    %v467 = vunpack.c.h.b16 %v424
    %v468 = vunpack.c.l.b16 %v425
    %v469 = vunpack.c.h.b16 %v425
    %v470 = vunpack.c.l.b16 %v426
    %v471 = vunpack.c.h.b16 %v426
    %v472 = vunpack.c.l.b16 %v427
    %v473 = vunpack.c.h.b16 %v427
    %v474 = vunpack.c.l.b16 %v428
    %v475 = vunpack.c.h.b16 %v428
    %v476 = vunpack.c.l.b16 %v429
    %v477 = vunpack.c.h.b16 %v429
    %v478 = vpack.c.b16 %v448, %v446
    %v479 = vpack.c.b16 %v449, %v447
    %v480 = vpack.c.b16 %v452, %v450
    %v481 = vpack.c.b16 %v453, %v451
    %v482 = vpack.c.b16 %v456, %v454
    %v483 = vpack.c.b16 %v457, %v455
    %v484 = vpack.c.b16 %v460, %v458
    %v485 = vpack.c.b16 %v461, %v459
    %v486 = vpack.c.b16 %v464, %v462
    %v487 = vpack.c.b16 %v465, %v463
    %v488 = vpack.c.b16 %v468, %v466
    %v489 = vpack.c.b16 %v469, %v467
    %v490 = vpack.c.b16 %v472, %v470
    %v491 = vpack.c.b16 %v473, %v471
    %v492 = vpack.c.b16 %v476, %v474
    %v493 = vpack.c.b16 %v477, %v475
    %510 = vmatprep.subr.bf16.mxu0 %v479
    %511 = vmatpush1.bf16.msra.mxu0 %v478
    %512 = vmatprep.subr.bf16.mxu0 %v481
    %513 = vmatpush1.bf16.msra.mxu0 %v480
    %514 = vmatprep.subr.bf16.mxu0 %v483
    %515 = vmatpush1.bf16.msra.mxu0 %v482
    %516 = vmatprep.subr.bf16.mxu0 %v485
    %517 = vmatpush1.bf16.msra.mxu0 %v484
    %518 = vmatprep.subr.bf16.mxu0 %v487
    %519 = vmatpush1.bf16.msra.mxu0 %v486
    %520 = vmatprep.subr.bf16.mxu0 %v489
    %521 = vmatpush1.bf16.msra.mxu0 %v488
    %522 = vmatprep.subr.bf16.mxu0 %v491
    %523 = vmatpush1.bf16.msra.mxu0 %v490
    %524 = vmatprep.subr.bf16.mxu0 %v493
    %525 = vmatpush1.bf16.msra.mxu0 %v492
    %526 = vmatprep.subr.bf16.mxu0 0
    %527 = vmatpush1.bf16.msra.mxu0 0
    %528 = vmatprep.subr.bf16.mxu0 0
    %529 = vmatpush1.bf16.msra.mxu0 0
    %530 = vmatprep.subr.bf16.mxu0 0
    %531 = vmatpush1.bf16.msra.mxu0 0
    %532 = vmatprep.subr.bf16.mxu0 0
    %533 = vmatpush1.bf16.msra.mxu0 0
    %534 = vmatprep.subr.bf16.mxu0 0
    %535 = vmatpush1.bf16.msra.mxu0 0
    %536 = vmatprep.subr.bf16.mxu0 0
    %537 = vmatpush1.bf16.msra.mxu0 0
    %538 = vmatprep.subr.bf16.mxu0 0
    %539 = vmatpush1.bf16.msra.mxu0 0
    %540 = vmatprep.subr.bf16.mxu0 0
    %541 = vmatpush1.bf16.msra.mxu0 0
    %542 = vmatprep.mubr.bf16.mxu0 0
    %543 = vmatmul.mubr.bf16.gmra.mrb[0].mxu0 %v411
    %v544 = vpop.f32.mrb[0].mxu0
    %v545 = vadd.f32 0.0, %v544
    %v546 = vpop.f32.mrb[0].mxu0
    %v547 = vadd.f32 0.0, %v546
    %v548 = vpop.f32.mrb[0].mxu0
    %v549 = vadd.f32 0.0, %v548
    %v550 = vpop.f32.mrb[0].mxu0
    %v551 = vadd.f32 0.0, %v550
    %552 = vmatprep.mubr.bf16.mxu0 0
    %553 = vmatmul.mubr.bf16.gmra.mrb[0].mxu0 %v412
    %v554 = vpop.f32.mrb[0].mxu0
    %v555 = vadd.f32 0.0, %v554
    %v556 = vpop.f32.mrb[0].mxu0
    %v557 = vadd.f32 0.0, %v556
    %v558 = vpop.f32.mrb[0].mxu0
    %v559 = vadd.f32 0.0, %v558
    %v560 = vpop.f32.mrb[0].mxu0
    %v561 = vadd.f32 0.0, %v560
    %562 = vmatprep.mubr.bf16.mxu0 0
    %563 = vmatmul.mubr.bf16.gmra.mrb[0].mxu0 %v413
    %v564 = vpop.f32.mrb[0].mxu0
    %v565 = vadd.f32 0.0, %v564
    %v566 = vpop.f32.mrb[0].mxu0
    %v567 = vadd.f32 0.0, %v566
    %v568 = vpop.f32.mrb[0].mxu0
    %v569 = vpop.f32.mrb[0].mxu0
    %570 = vdwg.mxu0
    %v571 = vld [vmem:[#allocation8 + $0x8] sm:$0xff]
    %v572 = vld [vmem:[#allocation8 + $0x10] sm:$0xff]
    %v573 = vld [vmem:[#allocation8 + $0x20] sm:$0xff]
    %v574 = vld [vmem:[#allocation8 + $0x28] sm:$0xff]
    %v575 = vld [vmem:[#allocation8 + $0x38] sm:$0xff]
    %v576 = vld [vmem:[#allocation8 + $0x40] sm:$0xff]
    %v577 = vld [vmem:[#allocation8 + $0x50] sm:$0xff]
    %v578 = vld [vmem:[#allocation8 + $0x58] sm:$0xff]
    %v579 = vld [vmem:[#allocation8 + $0x68] sm:$0xff]
    %v580 = vld [vmem:[#allocation8 + $0x70] sm:$0xff]
    %581 = vmatprep.subr.mxu0 %v547
    %582 = vmatpush1.msra.mxu0 %v545
    %583 = vmatprep.subr.mxu0 %v551
    %584 = vmatpush1.msra.mxu0 %v549
    %585 = vmatprep.subr.mxu0 %v557
    %586 = vmatpush1.msra.mxu0 %v555
    %587 = vmatprep.subr.mxu0 %v561
    %588 = vmatpush1.msra.mxu0 %v559
    %589 = vmatprep.subr.mxu0 %v567
    %590 = vmatpush1.msra.mxu0 %v565
    %591 = vmatprep.subr.mxu0 0.0
    %592 = vmatpush1.msra.mxu0 0.0
    %593 = vmatprep.subr.mxu0 0.0
    %594 = vmatpush1.msra.mxu0 0.0
    %595 = vmatprep.subr.mxu0 0.0
    %596 = vmatpush1.msra.mxu0 0.0
    %597 = vmatprep.subr.mxu0 0.0
    %598 = vmatpush1.msra.mxu0 0.0
    %599 = vmatprep.subr.mxu0 0.0
    %600 = vmatpush1.msra.mxu0 0.0
    %601 = vmatprep.subr.mxu0 0.0
    %602 = vmatpush1.msra.mxu0 0.0
    %603 = vmatprep.subr.mxu0 0.0
    %604 = vmatpush1.msra.mxu0 0.0
    %605 = vmatprep.subr.mxu0 0.0
    %606 = vmatpush1.msra.mxu0 0.0
    %607 = vmatprep.subr.mxu0 0.0
    %608 = vmatpush1.msra.mxu0 0.0
    %609 = vmatprep.subr.mxu0 0.0
    %610 = vmatpush1.msra.mxu0 0.0
    %611 = vmatprep.subr.mxu0 0.0
    %612 = vmatpush1.msra.mxu0 0.0
    %613 = vmatprep.subr.mxu0 0.0
    %614 = vmatpush1.msra.mxu0 0.0
    %615 = vmatprep.subr.mxu0 0.0
    %616 = vmatpush1.msra.mxu0 0.0
    %617 = vmatprep.subr.mxu0 0.0
    %618 = vmatpush1.msra.mxu0 0.0
    %619 = vmatprep.subr.mxu0 0.0
    %620 = vmatpush1.msra.mxu0 0.0
    %621 = vmatprep.subr.mxu0 0.0
    %622 = vmatpush1.msra.mxu0 0.0
    %623 = vmatprep.subr.mxu0 0.0
    %624 = vmatpush1.msra.mxu0 0.0
    %625 = vmatprep.subr.mxu0 0.0
    %626 = vmatpush1.msra.mxu0 0.0
    %627 = vmatprep.subr.mxu0 0.0
    %628 = vmatpush1.msra.mxu0 0.0
    %629 = vmatprep.subr.mxu0 0.0
    %630 = vmatpush1.msra.mxu0 0.0
    %631 = vmatprep.subr.mxu0 0.0
    %632 = vmatpush1.msra.mxu0 0.0
    %633 = vmatprep.subr.mxu0 0.0
    %634 = vmatpush1.msra.mxu0 0.0
    %635 = vmatprep.subr.mxu0 0.0
    %636 = vmatpush1.msra.mxu0 0.0
    %637 = vmatprep.subr.mxu0 0.0
    %638 = vmatpush1.msra.mxu0 0.0
    %639 = vmatprep.subr.mxu0 0.0
    %640 = vmatpush1.msra.mxu0 0.0
    %641 = vmatprep.subr.mxu0 0.0
    %642 = vmatpush1.msra.mxu0 0.0
    %643 = vmatprep.subr.mxu0 0.0
    %644 = vmatpush1.msra.mxu0 0.0
    %645 = vmatprep.mubr.f32.mxu0 0.0
    %646 = vmatmul.mubr.f32.gmra.mrb[0].mxu0 %v302
    %v647 = vpop.f32.mrb[0].mxu0
    %v648 = vadd.f32 %v571, %v647
    %v649 = vpop.f32.mrb[0].mxu0
    %v650 = vadd.f32 %v572, %v649
    %651 = vmatprep.mubr.f32.mxu0 0.0
    %652 = vmatmul.mubr.f32.gmra.mrb[0].mxu0 %v305
    %v653 = vpop.f32.mrb[0].mxu0
    %v654 = vadd.f32 %v573, %v653
    %v655 = vpop.f32.mrb[0].mxu0
    %v656 = vadd.f32 %v574, %v655
    %657 = vmatprep.mubr.f32.mxu0 0.0
    %658 = vmatmul.mubr.f32.gmra.mrb[0].mxu0 %v308
    %v659 = vpop.f32.mrb[0].mxu0
    %v660 = vadd.f32 %v575, %v659
    %v661 = vpop.f32.mrb[0].mxu0
    %v662 = vadd.f32 %v576, %v661
    %663 = vmatprep.mubr.f32.mxu0 0.0
    %664 = vmatmul.mubr.f32.gmra.mrb[0].mxu0 %v311
    %v665 = vpop.f32.mrb[0].mxu0
    %v666 = vadd.f32 %v577, %v665
    %v667 = vpop.f32.mrb[0].mxu0
    %v668 = vadd.f32 %v578, %v667
    %669 = vmatprep.mubr.f32.mxu0 0.0
    %670 = vmatmul.mubr.f32.gmra.mrb[0].mxu0 %v314
    %v671 = vpop.f32.mrb[0].mxu0
    %v672 = vadd.f32 %v579, %v671
    %v673 = vpop.f32.mrb[0].mxu0
    %v674 = vadd.f32 %v580, %v673
    %675 = vdwg.mxu0
    %v676 = vmax.f32 %v648, 0.0
    %v677 = vmax.f32 %v650, 0.0
    %v678 = vmax.f32 %v654, 0.0
    %v679 = vmax.f32 %v656, 0.0
    %v680 = vmax.f32 %v660, 0.0
    %v681 = vmax.f32 %v662, 0.0
    %v682 = vmax.f32 %v666, 0.0
    %v683 = vmax.f32 %v668, 0.0
    %v684 = vmax.f32 %v672, 0.0
    %v685 = vmax.f32 %v674, 0.0
    %v686 = vld [vmem:[#allocation7] sm:$0xff]
    %v688 = vsel %vm300, %v686, 0
    %690 = vmatprep.subr.mxu0 %v677
    %691 = vmatpush1.msra.mxu0 %v676
    %692 = vmatprep.subr.mxu0 %v679
    %693 = vmatpush1.msra.mxu0 %v678
    %694 = vmatprep.subr.mxu0 %v681
    %695 = vmatpush1.msra.mxu0 %v680
    %696 = vmatprep.subr.mxu0 %v683
    %697 = vmatpush1.msra.mxu0 %v682
    %698 = vmatprep.subr.mxu0 %v685
    %699 = vmatpush1.msra.mxu0 %v684
    %700 = vmatprep.subr.mxu0 0.0
    %701 = vmatpush1.msra.mxu0 0.0
    %702 = vmatprep.subr.mxu0 0.0
    %703 = vmatpush1.msra.mxu0 0.0
    %704 = vmatprep.subr.mxu0 0.0
    %705 = vmatpush1.msra.mxu0 0.0
    %706 = vmatprep.subr.mxu0 0.0
    %707 = vmatpush1.msra.mxu0 0.0
    %708 = vmatprep.subr.mxu0 0.0
    %709 = vmatpush1.msra.mxu0 0.0
    %710 = vmatprep.subr.mxu0 0.0
    %711 = vmatpush1.msra.mxu0 0.0
    %712 = vmatprep.subr.mxu0 0.0
    %713 = vmatpush1.msra.mxu0 0.0
    %714 = vmatprep.subr.mxu0 0.0
    %715 = vmatpush1.msra.mxu0 0.0
    %716 = vmatprep.subr.mxu0 0.0
    %717 = vmatpush1.msra.mxu0 0.0
    %718 = vmatprep.subr.mxu0 0.0
    %719 = vmatpush1.msra.mxu0 0.0
    %720 = vmatprep.subr.mxu0 0.0
    %721 = vmatpush1.msra.mxu0 0.0
    %722 = vmatprep.subr.mxu0 0.0
    %723 = vmatpush1.msra.mxu0 0.0
    %724 = vmatprep.subr.mxu0 0.0
    %725 = vmatpush1.msra.mxu0 0.0
    %726 = vmatprep.subr.mxu0 0.0
    %727 = vmatpush1.msra.mxu0 0.0
    %728 = vmatprep.subr.mxu0 0.0
    %729 = vmatpush1.msra.mxu0 0.0
    %730 = vmatprep.subr.mxu0 0.0
    %731 = vmatpush1.msra.mxu0 0.0
    %732 = vmatprep.subr.mxu0 0.0
    %733 = vmatpush1.msra.mxu0 0.0
    %734 = vmatprep.subr.mxu0 0.0
    %735 = vmatpush1.msra.mxu0 0.0
    %736 = vmatprep.subr.mxu0 0.0
    %737 = vmatpush1.msra.mxu0 0.0
    %738 = vmatprep.subr.mxu0 0.0
    %739 = vmatpush1.msra.mxu0 0.0
    %740 = vmatprep.subr.mxu0 0.0
    %741 = vmatpush1.msra.mxu0 0.0
    %742 = vmatprep.subr.mxu0 0.0
    %743 = vmatpush1.msra.mxu0 0.0
    %744 = vmatprep.subr.mxu0 0.0
    %745 = vmatpush1.msra.mxu0 0.0
    %746 = vmatprep.subr.mxu0 0.0
    %747 = vmatpush1.msra.mxu0 0.0
    %748 = vmatprep.subr.mxu0 0.0
    %749 = vmatpush1.msra.mxu0 0.0
    %750 = vmatprep.subr.mxu0 0.0
    %751 = vmatpush1.msra.mxu0 0.0
    %752 = vmatprep.subr.mxu0 0.0
    %753 = vmatpush1.msra.mxu0 0.0
    %754 = vmatprep.mubr.f32.mxu0 0.0
    %755 = vmatmul.mubr.f32.gmra.mrb[0].mxu0 %v688
    %v756 = vpop.f32.mrb[0].mxu0
    %v757 = vadd.f32 0.0, %v756
    %v758 = vpop.f32.mrb[0].mxu0
    %v759 = vadd.f32 0.0, %v758
    %760 = vdwg.mxu0
    %v761 = vpack.c.bf16 %v757, %v757
    %v762 = vpack.c.bf16 %v759, %v759
    %v763 = vld [vmem:[#allocation13] sm:$0xff]
    %v764 = vld [vmem:[#allocation13 + $0x8] sm:$0xff]
    %v765 = vld [vmem:[#allocation13 + $0x10] sm:$0xff]
    %v766 = vld [vmem:[#allocation13 + $0x18] sm:$0xff]
    %v767 = vld [vmem:[#allocation13 + $0x20] sm:$0xff]
    %v768 = vld [vmem:[#allocation13 + $0x28] sm:$0xff]
    %v769 = vld [vmem:[#allocation13 + $0x30] sm:$0xff]
    %v770 = vld [vmem:[#allocation13 + $0x38] sm:$0xff]
    %v771 = vld [vmem:[#allocation13 + $0x40] sm:$0xff]
    %v772 = vld [vmem:[#allocation13 + $0x48] sm:$0xff]
    %v773 = vld [vmem:[#allocation13 + $0x50] sm:$0xff]
    %v774 = vld [vmem:[#allocation13 + $0x58] sm:$0xff]
    %v775 = vld [vmem:[#allocation13 + $0x60] sm:$0xff]
    %v776 = vld [vmem:[#allocation13 + $0x68] sm:$0xff]
    %v777 = vld [vmem:[#allocation13 + $0x70] sm:$0xff]
    %v778 = vld [vmem:[#allocation13 + $0x78] sm:$0xff]
    %v779 = vld [vmem:[#allocation13 + $0x80] sm:$0xff]
    %v780 = vld [vmem:[#allocation13 + $0x88] sm:$0xff]
    %v781 = vld [vmem:[#allocation13 + $0x90] sm:$0xff]
    %v782 = vld [vmem:[#allocation13 + $0x98] sm:$0xff]
    %v783 = vld [vmem:[#allocation13 + $0xa0] sm:$0xff]
    %v784 = vld [vmem:[#allocation13 + $0xa8] sm:$0xff]
    %v785 = vld [vmem:[#allocation13 + $0xb0] sm:$0xff]
    %v786 = vld [vmem:[#allocation13 + $0xb8] sm:$0xff]
    %v787 = vld [vmem:[#allocation13 + $0xc0] sm:$0xff]
    %v788 = vld [vmem:[#allocation13 + $0xc8] sm:$0xff]
    %v789 = vld [vmem:[#allocation13 + $0xd0] sm:$0xff]
    %v790 = vld [vmem:[#allocation13 + $0xd8] sm:$0xff]
    %v791 = vld [vmem:[#allocation13 + $0xe0] sm:$0xff]
    %v792 = vld [vmem:[#allocation13 + $0xe8] sm:$0xff]
    %v793 = vld [vmem:[#allocation13 + $0xf0] sm:$0xff]
    %v794 = vld [vmem:[#allocation13 + $0xf8] sm:$0xff]
    %v795 = vld [vmem:[#allocation13 + $0x100] sm:$0xff]
    %v796 = vld [vmem:[#allocation13 + $0x108] sm:$0xff]
    %v797 = vld [vmem:[#allocation13 + $0x110] sm:$0xff]
    %v798 = vld [vmem:[#allocation13 + $0x118] sm:$0xff]
    %v799 = vld [vmem:[#allocation13 + $0x120] sm:$0xff]
    %v800 = vld [vmem:[#allocation13 + $0x128] sm:$0xff]
    %v801 = vld [vmem:[#allocation13 + $0x130] sm:$0xff]
    %v802 = vld [vmem:[#allocation13 + $0x138] sm:$0xff]
    %v803 = vld [vmem:[#allocation13 + $0x140] sm:$0xff]
    %v804 = vld [vmem:[#allocation13 + $0x148] sm:$0xff]
    %v805 = vld [vmem:[#allocation13 + $0x150] sm:$0xff]
    %v806 = vld [vmem:[#allocation13 + $0x158] sm:$0xff]
    %v807 = vld [vmem:[#allocation13 + $0x160] sm:$0xff]
    %v808 = vld [vmem:[#allocation13 + $0x168] sm:$0xff]
    %v809 = vld [vmem:[#allocation13 + $0x170] sm:$0xff]
    %v810 = vld [vmem:[#allocation13 + $0x178] sm:$0xff]
    %v811 = vld [vmem:[#allocation13 + $0x180] sm:$0xff]
    %v812 = vld [vmem:[#allocation13 + $0x188] sm:$0xff]
    %v813 = vld [vmem:[#allocation13 + $0x190] sm:$0xff]
    %v814 = vld [vmem:[#allocation13 + $0x198] sm:$0xff]
    %v815 = vld [vmem:[#allocation13 + $0x1a0] sm:$0xff]
    %v816 = vld [vmem:[#allocation13 + $0x1a8] sm:$0xff]
    %v817 = vld [vmem:[#allocation13 + $0x1b0] sm:$0xff]
    %v818 = vld [vmem:[#allocation13 + $0x1b8] sm:$0xff]
    %v819 = vld [vmem:[#allocation13 + $0x1c0] sm:$0xff]
    %v820 = vld [vmem:[#allocation13 + $0x1c8] sm:$0xff]
    %v821 = vld [vmem:[#allocation13 + $0x1d0] sm:$0xff]
    %v822 = vld [vmem:[#allocation13 + $0x1d8] sm:$0xff]
    %v823 = vld [vmem:[#allocation13 + $0x1e0] sm:$0xff]
    %v824 = vld [vmem:[#allocation13 + $0x1e8] sm:$0xff]
    %v825 = vld [vmem:[#allocation13 + $0x1f0] sm:$0xff]
    %v826 = vld [vmem:[#allocation13 + $0x1f8] sm:$0xff]
    %v827 = vld [vmem:[%s10] ss:$4 sm:$0xf]
    %v829 = vlaneseq
    %v830 = vshrl.u32 %v829, 7
    %v831 = vsub.s32 0, %v830
    %v832 = vrot.slane %v827, %v831
    %v833 = vlaneseq
    %v834 = vshrl.u32 %v833, 7
    %v835 = vsub.s32 1, %v834
    %v836 = vrot.slane %v827, %v835
    %v837 = vlaneseq
    %v838 = vshrl.u32 %v837, 7
    %v839 = vsub.s32 2, %v838
    %v840 = vrot.slane %v827, %v839
    %v841 = vlaneseq
    %v842 = vshrl.u32 %v841, 7
    %v843 = vsub.s32 3, %v842
    %v844 = vrot.slane %v827, %v843
    %v913 = vunpack.c.l.b16 %v763
    %v914 = vunpack.c.h.b16 %v763
    %v915 = vunpack.c.l.b16 %v764
    %v916 = vunpack.c.h.b16 %v764
    %v917 = vunpack.c.l.b16 %v765
    %v918 = vunpack.c.h.b16 %v765
    %v919 = vunpack.c.l.b16 %v766
    %v920 = vunpack.c.h.b16 %v766
    %v921 = vunpack.c.l.b16 %v767
    %v922 = vunpack.c.h.b16 %v767
    %v923 = vunpack.c.l.b16 %v768
    %v924 = vunpack.c.h.b16 %v768
    %v925 = vunpack.c.l.b16 %v769
    %v926 = vunpack.c.h.b16 %v769
    %v927 = vunpack.c.l.b16 %v770
    %v928 = vunpack.c.h.b16 %v770
    %v929 = vunpack.c.l.b16 %v771
    %v930 = vunpack.c.h.b16 %v771
    %v931 = vunpack.c.l.b16 %v772
    %v932 = vunpack.c.h.b16 %v772
    %v933 = vunpack.c.l.b16 %v773
    %v934 = vunpack.c.h.b16 %v773
    %v935 = vunpack.c.l.b16 %v774
    %v936 = vunpack.c.h.b16 %v774
    %v937 = vunpack.c.l.b16 %v775
    %v938 = vunpack.c.h.b16 %v775
    %v939 = vunpack.c.l.b16 %v776
    %v940 = vunpack.c.h.b16 %v776
    %v941 = vunpack.c.l.b16 %v777
    %v942 = vunpack.c.h.b16 %v777
    %v943 = vunpack.c.l.b16 %v778
    %v944 = vunpack.c.h.b16 %v778
    %v945 = vunpack.c.l.b16 %v779
    %v946 = vunpack.c.h.b16 %v779
    %v947 = vunpack.c.l.b16 %v780
    %v948 = vunpack.c.h.b16 %v780
    %v949 = vunpack.c.l.b16 %v781
    %v950 = vunpack.c.h.b16 %v781
    %v951 = vunpack.c.l.b16 %v782
    %v952 = vunpack.c.h.b16 %v782
    %v953 = vunpack.c.l.b16 %v783
    %v954 = vunpack.c.h.b16 %v783
    %v955 = vunpack.c.l.b16 %v784
    %v956 = vunpack.c.h.b16 %v784
    %v957 = vunpack.c.l.b16 %v785
    %v958 = vunpack.c.h.b16 %v785
    %v959 = vunpack.c.l.b16 %v786
    %v960 = vunpack.c.h.b16 %v786
    %v961 = vunpack.c.l.b16 %v787
    %v962 = vunpack.c.h.b16 %v787
    %v963 = vunpack.c.l.b16 %v788
    %v964 = vunpack.c.h.b16 %v788
    %v965 = vunpack.c.l.b16 %v789
    %v966 = vunpack.c.h.b16 %v789
    %v967 = vunpack.c.l.b16 %v790
    %v968 = vunpack.c.h.b16 %v790
    %v969 = vunpack.c.l.b16 %v791
    %v970 = vunpack.c.h.b16 %v791
    %v971 = vunpack.c.l.b16 %v792
    %v972 = vunpack.c.h.b16 %v792
    %v973 = vunpack.c.l.b16 %v793
    %v974 = vunpack.c.h.b16 %v793
    %v975 = vunpack.c.l.b16 %v794
    %v976 = vunpack.c.h.b16 %v794
    %v977 = vunpack.c.l.b16 %v795
    %v978 = vunpack.c.h.b16 %v795
    %v979 = vunpack.c.l.b16 %v796
    %v980 = vunpack.c.h.b16 %v796
    %v981 = vunpack.c.l.b16 %v797
    %v982 = vunpack.c.h.b16 %v797
    %v983 = vunpack.c.l.b16 %v798
    %v984 = vunpack.c.h.b16 %v798
    %v985 = vunpack.c.l.b16 %v799
    %v986 = vunpack.c.h.b16 %v799
    %v987 = vunpack.c.l.b16 %v800
    %v988 = vunpack.c.h.b16 %v800
    %v989 = vunpack.c.l.b16 %v801
    %v990 = vunpack.c.h.b16 %v801
    %v991 = vunpack.c.l.b16 %v802
    %v992 = vunpack.c.h.b16 %v802
    %v993 = vunpack.c.l.b16 %v803
    %v994 = vunpack.c.h.b16 %v803
    %v995 = vunpack.c.l.b16 %v804
    %v996 = vunpack.c.h.b16 %v804
    %v997 = vunpack.c.l.b16 %v805
    %v998 = vunpack.c.h.b16 %v805
    %v999 = vunpack.c.l.b16 %v806
    %v1000 = vunpack.c.h.b16 %v806
    %v1001 = vunpack.c.l.b16 %v807
    %v1002 = vunpack.c.h.b16 %v807
    %v1003 = vunpack.c.l.b16 %v808
    %v1004 = vunpack.c.h.b16 %v808
    %v1005 = vunpack.c.l.b16 %v809
    %v1006 = vunpack.c.h.b16 %v809
    %v1007 = vunpack.c.l.b16 %v810
    %v1008 = vunpack.c.h.b16 %v810
    %v1009 = vunpack.c.l.b16 %v811
    %v1010 = vunpack.c.h.b16 %v811
    %v1011 = vunpack.c.l.b16 %v812
    %v1012 = vunpack.c.h.b16 %v812
    %v1013 = vunpack.c.l.b16 %v813
    %v1014 = vunpack.c.h.b16 %v813
    %v1015 = vunpack.c.l.b16 %v814
    %v1016 = vunpack.c.h.b16 %v814
    %v1017 = vunpack.c.l.b16 %v815
    %v1018 = vunpack.c.h.b16 %v815
    %v1019 = vunpack.c.l.b16 %v816
    %v1020 = vunpack.c.h.b16 %v816
    %v1021 = vunpack.c.l.b16 %v817
    %v1022 = vunpack.c.h.b16 %v817
    %v1023 = vunpack.c.l.b16 %v818
    %v1024 = vunpack.c.h.b16 %v818
    %v1025 = vunpack.c.l.b16 %v819
    %v1026 = vunpack.c.h.b16 %v819
    %v1027 = vunpack.c.l.b16 %v820
    %v1028 = vunpack.c.h.b16 %v820
    %v1029 = vunpack.c.l.b16 %v821
    %v1030 = vunpack.c.h.b16 %v821
    %v1031 = vunpack.c.l.b16 %v822
    %v1032 = vunpack.c.h.b16 %v822
    %v1033 = vunpack.c.l.b16 %v823
    %v1034 = vunpack.c.h.b16 %v823
    %v1035 = vunpack.c.l.b16 %v824
    %v1036 = vunpack.c.h.b16 %v824
    %v1037 = vunpack.c.l.b16 %v825
    %v1038 = vunpack.c.h.b16 %v825
    %v1039 = vunpack.c.l.b16 %v826
    %v1040 = vunpack.c.h.b16 %v826
    %v1041 = vpack.c.b16 %v917, %v913
    %v1042 = vpack.c.b16 %v918, %v914
    %v1043 = vpack.c.b16 %v919, %v915
    %v1044 = vpack.c.b16 %v920, %v916
    %v1045 = vpack.c.b16 %v925, %v921
    %v1046 = vpack.c.b16 %v926, %v922
    %v1047 = vpack.c.b16 %v927, %v923
    %v1048 = vpack.c.b16 %v928, %v924
    %v1049 = vpack.c.b16 %v933, %v929
    %v1050 = vpack.c.b16 %v934, %v930
    %v1051 = vpack.c.b16 %v935, %v931
    %v1052 = vpack.c.b16 %v936, %v932
    %v1053 = vpack.c.b16 %v941, %v937
    %v1054 = vpack.c.b16 %v942, %v938
    %v1055 = vpack.c.b16 %v943, %v939
    %v1056 = vpack.c.b16 %v944, %v940
    %v1057 = vpack.c.b16 %v949, %v945
    %v1058 = vpack.c.b16 %v950, %v946
    %v1059 = vpack.c.b16 %v951, %v947
    %v1060 = vpack.c.b16 %v952, %v948
    %v1061 = vpack.c.b16 %v957, %v953
    %v1062 = vpack.c.b16 %v958, %v954
    %v1063 = vpack.c.b16 %v959, %v955
    %v1064 = vpack.c.b16 %v960, %v956
    %v1065 = vpack.c.b16 %v965, %v961
    %v1066 = vpack.c.b16 %v966, %v962
    %v1067 = vpack.c.b16 %v967, %v963
    %v1068 = vpack.c.b16 %v968, %v964
    %v1069 = vpack.c.b16 %v973, %v969
    %v1070 = vpack.c.b16 %v974, %v970
    %v1071 = vpack.c.b16 %v975, %v971
    %v1072 = vpack.c.b16 %v976, %v972
    %v1073 = vpack.c.b16 %v981, %v977
    %v1074 = vpack.c.b16 %v982, %v978
    %v1075 = vpack.c.b16 %v983, %v979
    %v1076 = vpack.c.b16 %v984, %v980
    %v1077 = vpack.c.b16 %v989, %v985
    %v1078 = vpack.c.b16 %v990, %v986
    %v1079 = vpack.c.b16 %v991, %v987
    %v1080 = vpack.c.b16 %v992, %v988
    %v1081 = vpack.c.b16 %v997, %v993
    %v1082 = vpack.c.b16 %v998, %v994
    %v1083 = vpack.c.b16 %v999, %v995
    %v1084 = vpack.c.b16 %v1000, %v996
    %v1085 = vpack.c.b16 %v1005, %v1001
    %v1086 = vpack.c.b16 %v1006, %v1002
    %v1087 = vpack.c.b16 %v1007, %v1003
    %v1088 = vpack.c.b16 %v1008, %v1004
    %v1089 = vpack.c.b16 %v1013, %v1009
    %v1090 = vpack.c.b16 %v1014, %v1010
    %v1091 = vpack.c.b16 %v1015, %v1011
    %v1092 = vpack.c.b16 %v1016, %v1012
    %v1093 = vpack.c.b16 %v1021, %v1017
    %v1094 = vpack.c.b16 %v1022, %v1018
    %v1095 = vpack.c.b16 %v1023, %v1019
    %v1096 = vpack.c.b16 %v1024, %v1020
    %v1097 = vpack.c.b16 %v1029, %v1025
    %v1098 = vpack.c.b16 %v1030, %v1026
    %v1099 = vpack.c.b16 %v1031, %v1027
    %v1100 = vpack.c.b16 %v1032, %v1028
    %v1101 = vpack.c.b16 %v1037, %v1033
    %v1102 = vpack.c.b16 %v1038, %v1034
    %v1103 = vpack.c.b16 %v1039, %v1035
    %v1104 = vpack.c.b16 %v1040, %v1036
    %1169 = vmatprep.subr.bf16.mxu0 %v1042
    %1170 = vmatpush1.bf16.msra.mxu0 %v1041
    %1171 = vmatprep.subr.bf16.mxu0 %v1046
    %1172 = vmatpush1.bf16.msra.mxu0 %v1045
    %1173 = vmatprep.subr.bf16.mxu0 %v1050
    %1174 = vmatpush1.bf16.msra.mxu0 %v1049
    %1175 = vmatprep.subr.bf16.mxu0 %v1054
    %1176 = vmatpush1.bf16.msra.mxu0 %v1053
    %1177 = vmatprep.subr.bf16.mxu0 %v1058
    %1178 = vmatpush1.bf16.msra.mxu0 %v1057
    %1179 = vmatprep.subr.bf16.mxu0 %v1062
    %1180 = vmatpush1.bf16.msra.mxu0 %v1061
    %1181 = vmatprep.subr.bf16.mxu0 %v1066
    %1182 = vmatpush1.bf16.msra.mxu0 %v1065
    %1183 = vmatprep.subr.bf16.mxu0 %v1070
    %1184 = vmatpush1.bf16.msra.mxu0 %v1069
    %1185 = vmatprep.subr.bf16.mxu0 %v1074
    %1186 = vmatpush1.bf16.msra.mxu0 %v1073
    %1187 = vmatprep.subr.bf16.mxu0 %v1078
    %1188 = vmatpush1.bf16.msra.mxu0 %v1077
    %1189 = vmatprep.subr.bf16.mxu0 %v1082
    %1190 = vmatpush1.bf16.msra.mxu0 %v1081
    %1191 = vmatprep.subr.bf16.mxu0 %v1086
    %1192 = vmatpush1.bf16.msra.mxu0 %v1085
    %1193 = vmatprep.subr.bf16.mxu0 %v1090
    %1194 = vmatpush1.bf16.msra.mxu0 %v1089
    %1195 = vmatprep.subr.bf16.mxu0 %v1094
    %1196 = vmatpush1.bf16.msra.mxu0 %v1093
    %1197 = vmatprep.subr.bf16.mxu0 %v1098
    %1198 = vmatpush1.bf16.msra.mxu0 %v1097
    %1199 = vmatprep.subr.bf16.mxu0 %v1102
    %1200 = vmatpush1.bf16.msra.mxu0 %v1101
    %1201 = vmatprep.mubr.bf16.mxu0 %v762
    %1202 = vmatmul.mubr.bf16.gmra.mrb[0].mxu0 %v761
    %v1203 = vpop.f32.mrb[0].mxu0
    %v1204 = vadd.f32 %v832, %v1203
    %v1205 = vpop.f32.mrb[0].mxu0
    %v1206 = vadd.f32 %v836, %v1205
    %v1207 = vpop.f32.mrb[0].mxu0
    %v1208 = vpop.f32.mrb[0].mxu0
    %1209 = vdwg.mxu0
    %1210 = vmatprep.subr.bf16.mxu0 %v1044
    %1211 = vmatpush1.bf16.msra.mxu0 %v1043
    %1212 = vmatprep.subr.bf16.mxu0 %v1048
    %1213 = vmatpush1.bf16.msra.mxu0 %v1047
    %1214 = vmatprep.subr.bf16.mxu0 %v1052
    %1215 = vmatpush1.bf16.msra.mxu0 %v1051
    %1216 = vmatprep.subr.bf16.mxu0 %v1056
    %1217 = vmatpush1.bf16.msra.mxu0 %v1055
    %1218 = vmatprep.subr.bf16.mxu0 %v1060
    %1219 = vmatpush1.bf16.msra.mxu0 %v1059
    %1220 = vmatprep.subr.bf16.mxu0 %v1064
    %1221 = vmatpush1.bf16.msra.mxu0 %v1063
    %1222 = vmatprep.subr.bf16.mxu0 %v1068
    %1223 = vmatpush1.bf16.msra.mxu0 %v1067
    %1224 = vmatprep.subr.bf16.mxu0 %v1072
    %1225 = vmatpush1.bf16.msra.mxu0 %v1071
    %1226 = vmatprep.subr.bf16.mxu0 %v1076
    %1227 = vmatpush1.bf16.msra.mxu0 %v1075
    %1228 = vmatprep.subr.bf16.mxu0 %v1080
    %1229 = vmatpush1.bf16.msra.mxu0 %v1079
    %1230 = vmatprep.subr.bf16.mxu0 %v1084
    %1231 = vmatpush1.bf16.msra.mxu0 %v1083
    %1232 = vmatprep.subr.bf16.mxu0 %v1088
    %1233 = vmatpush1.bf16.msra.mxu0 %v1087
    %1234 = vmatprep.subr.bf16.mxu0 %v1092
    %1235 = vmatpush1.bf16.msra.mxu0 %v1091
    %1236 = vmatprep.subr.bf16.mxu0 %v1096
    %1237 = vmatpush1.bf16.msra.mxu0 %v1095
    %1238 = vmatprep.subr.bf16.mxu0 %v1100
    %1239 = vmatpush1.bf16.msra.mxu0 %v1099
    %1240 = vmatprep.subr.bf16.mxu0 %v1104
    %1241 = vmatpush1.bf16.msra.mxu0 %v1103
    %1242 = vmatprep.mubr.bf16.mxu0 %v762
    %1243 = vmatmul.mubr.bf16.gmra.mrb[0].mxu0 %v761
    %v1244 = vpop.f32.mrb[0].mxu0
    %v1245 = vadd.f32 %v840, %v1244
    %v1246 = vpop.f32.mrb[0].mxu0
    %v1247 = vadd.f32 %v844, %v1246
    %v1248 = vpop.f32.mrb[0].mxu0
    %v1249 = vpop.f32.mrb[0].mxu0
    %1250 = vdwg.mxu0
    %v1251 = vmax.f32 %v1204, 0.0
    %v1252 = vmax.f32 %v1206, 0.0
    %v1253 = vmax.f32 %v1245, 0.0
    %v1254 = vmax.f32 %v1247, 0.0
    %v1255 = vpack.c.bf16 %v1251, %v1251
    %v1256 = vpack.c.bf16 %v1252, %v1252
    %v1257 = vpack.c.bf16 %v1253, %v1253
    %v1258 = vpack.c.bf16 %v1254, %v1254
    %v1259 = vld [vmem:[#allocation14] sm:$0xff]
    %v1260 = vld [vmem:[#allocation14 + $0x8] sm:$0xff]
    %v1261 = vld [vmem:[#allocation14 + $0x10] sm:$0xff]
    %v1262 = vld [vmem:[#allocation14 + $0x18] sm:$0xff]
    %v1263 = vld [vmem:[#allocation14 + $0x20] sm:$0xff]
    %v1264 = vld [vmem:[#allocation14 + $0x28] sm:$0xff]
    %v1265 = vld [vmem:[#allocation14 + $0x30] sm:$0xff]
    %v1266 = vld [vmem:[#allocation14 + $0x38] sm:$0xff]
    %v1267 = vld [vmem:[#allocation14 + $0x40] sm:$0xff]
    %v1268 = vld [vmem:[#allocation14 + $0x48] sm:$0xff]
    %v1269 = vld [vmem:[#allocation14 + $0x50] sm:$0xff]
    %v1270 = vld [vmem:[#allocation14 + $0x58] sm:$0xff]
    %v1271 = vld [vmem:[#allocation14 + $0x60] sm:$0xff]
    %v1272 = vld [vmem:[#allocation14 + $0x68] sm:$0xff]
    %v1273 = vld [vmem:[#allocation14 + $0x70] sm:$0xff]
    %v1274 = vld [vmem:[#allocation14 + $0x78] sm:$0xff]
    %v1275 = vld [vmem:[#allocation14 + $0x80] sm:$0xff]
    %v1276 = vld [vmem:[#allocation14 + $0x88] sm:$0xff]
    %v1277 = vld [vmem:[#allocation14 + $0x90] sm:$0xff]
    %v1278 = vld [vmem:[#allocation14 + $0x98] sm:$0xff]
    %v1279 = vld [vmem:[#allocation14 + $0xa0] sm:$0xff]
    %v1280 = vld [vmem:[#allocation14 + $0xa8] sm:$0xff]
    %v1281 = vld [vmem:[#allocation14 + $0xb0] sm:$0xff]
    %v1282 = vld [vmem:[#allocation14 + $0xb8] sm:$0xff]
    %v1283 = vld [vmem:[#allocation14 + $0xc0] sm:$0xff]
    %v1284 = vld [vmem:[#allocation14 + $0xc8] sm:$0xff]
    %v1285 = vld [vmem:[#allocation14 + $0xd0] sm:$0xff]
    %v1286 = vld [vmem:[#allocation14 + $0xd8] sm:$0xff]
    %v1287 = vld [vmem:[#allocation14 + $0xe0] sm:$0xff]
    %v1288 = vld [vmem:[#allocation14 + $0xe8] sm:$0xff]
    %v1289 = vld [vmem:[#allocation14 + $0xf0] sm:$0xff]
    %v1290 = vld [vmem:[#allocation14 + $0xf8] sm:$0xff]
    %v1291 = vld [vmem:[#allocation14 + $0x100] sm:$0xff]
    %v1292 = vld [vmem:[#allocation14 + $0x108] sm:$0xff]
    %v1293 = vld [vmem:[#allocation14 + $0x110] sm:$0xff]
    %v1294 = vld [vmem:[#allocation14 + $0x118] sm:$0xff]
    %v1295 = vld [vmem:[#allocation14 + $0x120] sm:$0xff]
    %v1296 = vld [vmem:[#allocation14 + $0x128] sm:$0xff]
    %v1297 = vld [vmem:[#allocation14 + $0x130] sm:$0xff]
    %v1298 = vld [vmem:[#allocation14 + $0x138] sm:$0xff]
    %v1299 = vld [vmem:[#allocation14 + $0x140] sm:$0xff]
    %v1300 = vld [vmem:[#allocation14 + $0x148] sm:$0xff]
    %v1301 = vld [vmem:[#allocation14 + $0x150] sm:$0xff]
    %v1302 = vld [vmem:[#allocation14 + $0x158] sm:$0xff]
    %v1303 = vld [vmem:[#allocation14 + $0x160] sm:$0xff]
    %v1304 = vld [vmem:[#allocation14 + $0x168] sm:$0xff]
    %v1305 = vld [vmem:[#allocation14 + $0x170] sm:$0xff]
    %v1306 = vld [vmem:[#allocation14 + $0x178] sm:$0xff]
    %v1307 = vld [vmem:[#allocation14 + $0x180] sm:$0xff]
    %v1308 = vld [vmem:[#allocation14 + $0x188] sm:$0xff]
    %v1309 = vld [vmem:[#allocation14 + $0x190] sm:$0xff]
    %v1310 = vld [vmem:[#allocation14 + $0x198] sm:$0xff]
    %v1311 = vld [vmem:[#allocation14 + $0x1a0] sm:$0xff]
    %v1312 = vld [vmem:[#allocation14 + $0x1a8] sm:$0xff]
    %v1313 = vld [vmem:[#allocation14 + $0x1b0] sm:$0xff]
    %v1314 = vld [vmem:[#allocation14 + $0x1b8] sm:$0xff]
    %v1315 = vld [vmem:[#allocation14 + $0x1c0] sm:$0xff]
    %v1316 = vld [vmem:[#allocation14 + $0x1c8] sm:$0xff]
    %v1317 = vld [vmem:[#allocation14 + $0x1d0] sm:$0xff]
    %v1318 = vld [vmem:[#allocation14 + $0x1d8] sm:$0xff]
    %v1319 = vld [vmem:[#allocation14 + $0x1e0] sm:$0xff]
    %v1320 = vld [vmem:[#allocation14 + $0x1e8] sm:$0xff]
    %v1321 = vld [vmem:[#allocation14 + $0x1f0] sm:$0xff]
    %v1322 = vld [vmem:[#allocation14 + $0x1f8] sm:$0xff]
    %s1323 = scalar_lea.vmem %s10, 1
    %v1324 = vld [vmem:[%s1323] ss:$4 sm:$0x3]
    %v1326 = vlaneseq
    %v1327 = vshrl.u32 %v1326, 7
    %v1328 = vsub.s32 0, %v1327
    %v1329 = vrot.slane %v1324, %v1328
    %v1330 = vlaneseq
    %v1331 = vshrl.u32 %v1330, 7
    %v1332 = vsub.s32 1, %v1331
    %v1333 = vrot.slane %v1324, %v1332
    %v1400 = vunpack.c.l.b16 %v1259
    %v1401 = vunpack.c.h.b16 %v1259
    %v1402 = vunpack.c.l.b16 %v1260
    %v1403 = vunpack.c.h.b16 %v1260
    %v1404 = vunpack.c.l.b16 %v1261
    %v1405 = vunpack.c.h.b16 %v1261
    %v1406 = vunpack.c.l.b16 %v1262
    %v1407 = vunpack.c.h.b16 %v1262
    %v1408 = vunpack.c.l.b16 %v1263
    %v1409 = vunpack.c.h.b16 %v1263
    %v1410 = vunpack.c.l.b16 %v1264
    %v1411 = vunpack.c.h.b16 %v1264
    %v1412 = vunpack.c.l.b16 %v1265
    %v1413 = vunpack.c.h.b16 %v1265
    %v1414 = vunpack.c.l.b16 %v1266
    %v1415 = vunpack.c.h.b16 %v1266
    %v1416 = vunpack.c.l.b16 %v1267
    %v1417 = vunpack.c.h.b16 %v1267
    %v1418 = vunpack.c.l.b16 %v1268
    %v1419 = vunpack.c.h.b16 %v1268
    %v1420 = vunpack.c.l.b16 %v1269
    %v1421 = vunpack.c.h.b16 %v1269
    %v1422 = vunpack.c.l.b16 %v1270
    %v1423 = vunpack.c.h.b16 %v1270
    %v1424 = vunpack.c.l.b16 %v1271
    %v1425 = vunpack.c.h.b16 %v1271
    %v1426 = vunpack.c.l.b16 %v1272
    %v1427 = vunpack.c.h.b16 %v1272
    %v1428 = vunpack.c.l.b16 %v1273
    %v1429 = vunpack.c.h.b16 %v1273
    %v1430 = vunpack.c.l.b16 %v1274
    %v1431 = vunpack.c.h.b16 %v1274
    %v1432 = vunpack.c.l.b16 %v1275
    %v1433 = vunpack.c.h.b16 %v1275
    %v1434 = vunpack.c.l.b16 %v1276
    %v1435 = vunpack.c.h.b16 %v1276
    %v1436 = vunpack.c.l.b16 %v1277
    %v1437 = vunpack.c.h.b16 %v1277
    %v1438 = vunpack.c.l.b16 %v1278
    %v1439 = vunpack.c.h.b16 %v1278
    %v1440 = vunpack.c.l.b16 %v1279
    %v1441 = vunpack.c.h.b16 %v1279
    %v1442 = vunpack.c.l.b16 %v1280
    %v1443 = vunpack.c.h.b16 %v1280
    %v1444 = vunpack.c.l.b16 %v1281
    %v1445 = vunpack.c.h.b16 %v1281
    %v1446 = vunpack.c.l.b16 %v1282
    %v1447 = vunpack.c.h.b16 %v1282
    %v1448 = vunpack.c.l.b16 %v1283
    %v1449 = vunpack.c.h.b16 %v1283
    %v1450 = vunpack.c.l.b16 %v1284
    %v1451 = vunpack.c.h.b16 %v1284
    %v1452 = vunpack.c.l.b16 %v1285
    %v1453 = vunpack.c.h.b16 %v1285
    %v1454 = vunpack.c.l.b16 %v1286
    %v1455 = vunpack.c.h.b16 %v1286
    %v1456 = vunpack.c.l.b16 %v1287
    %v1457 = vunpack.c.h.b16 %v1287
    %v1458 = vunpack.c.l.b16 %v1288
    %v1459 = vunpack.c.h.b16 %v1288
    %v1460 = vunpack.c.l.b16 %v1289
    %v1461 = vunpack.c.h.b16 %v1289
    %v1462 = vunpack.c.l.b16 %v1290
    %v1463 = vunpack.c.h.b16 %v1290
    %v1464 = vunpack.c.l.b16 %v1291
    %v1465 = vunpack.c.h.b16 %v1291
    %v1466 = vunpack.c.l.b16 %v1292
    %v1467 = vunpack.c.h.b16 %v1292
    %v1468 = vunpack.c.l.b16 %v1293
    %v1469 = vunpack.c.h.b16 %v1293
    %v1470 = vunpack.c.l.b16 %v1294
    %v1471 = vunpack.c.h.b16 %v1294
    %v1472 = vunpack.c.l.b16 %v1295
    %v1473 = vunpack.c.h.b16 %v1295
    %v1474 = vunpack.c.l.b16 %v1296
    %v1475 = vunpack.c.h.b16 %v1296
    %v1476 = vunpack.c.l.b16 %v1297
    %v1477 = vunpack.c.h.b16 %v1297
    %v1478 = vunpack.c.l.b16 %v1298
    %v1479 = vunpack.c.h.b16 %v1298
    %v1480 = vunpack.c.l.b16 %v1299
    %v1481 = vunpack.c.h.b16 %v1299
    %v1482 = vunpack.c.l.b16 %v1300
    %v1483 = vunpack.c.h.b16 %v1300
    %v1484 = vunpack.c.l.b16 %v1301
    %v1485 = vunpack.c.h.b16 %v1301
    %v1486 = vunpack.c.l.b16 %v1302
    %v1487 = vunpack.c.h.b16 %v1302
    %v1488 = vunpack.c.l.b16 %v1303
    %v1489 = vunpack.c.h.b16 %v1303
    %v1490 = vunpack.c.l.b16 %v1304
    %v1491 = vunpack.c.h.b16 %v1304
    %v1492 = vunpack.c.l.b16 %v1305
    %v1493 = vunpack.c.h.b16 %v1305
    %v1494 = vunpack.c.l.b16 %v1306
    %v1495 = vunpack.c.h.b16 %v1306
    %v1496 = vunpack.c.l.b16 %v1307
    %v1497 = vunpack.c.h.b16 %v1307
    %v1498 = vunpack.c.l.b16 %v1308
    %v1499 = vunpack.c.h.b16 %v1308
    %v1500 = vunpack.c.l.b16 %v1309
    %v1501 = vunpack.c.h.b16 %v1309
    %v1502 = vunpack.c.l.b16 %v1310
    %v1503 = vunpack.c.h.b16 %v1310
    %v1504 = vunpack.c.l.b16 %v1311
    %v1505 = vunpack.c.h.b16 %v1311
    %v1506 = vunpack.c.l.b16 %v1312
    %v1507 = vunpack.c.h.b16 %v1312
    %v1508 = vunpack.c.l.b16 %v1313
    %v1509 = vunpack.c.h.b16 %v1313
    %v1510 = vunpack.c.l.b16 %v1314
    %v1511 = vunpack.c.h.b16 %v1314
    %v1512 = vunpack.c.l.b16 %v1315
    %v1513 = vunpack.c.h.b16 %v1315
    %v1514 = vunpack.c.l.b16 %v1316
    %v1515 = vunpack.c.h.b16 %v1316
    %v1516 = vunpack.c.l.b16 %v1317
    %v1517 = vunpack.c.h.b16 %v1317
    %v1518 = vunpack.c.l.b16 %v1318
    %v1519 = vunpack.c.h.b16 %v1318
    %v1520 = vunpack.c.l.b16 %v1319
    %v1521 = vunpack.c.h.b16 %v1319
    %v1522 = vunpack.c.l.b16 %v1320
    %v1523 = vunpack.c.h.b16 %v1320
    %v1524 = vunpack.c.l.b16 %v1321
    %v1525 = vunpack.c.h.b16 %v1321
    %v1526 = vunpack.c.l.b16 %v1322
    %v1527 = vunpack.c.h.b16 %v1322
    %v1528 = vpack.c.b16 %v1402, %v1400
    %v1529 = vpack.c.b16 %v1403, %v1401
    %v1530 = vpack.c.b16 %v1406, %v1404
    %v1531 = vpack.c.b16 %v1407, %v1405
    %v1532 = vpack.c.b16 %v1410, %v1408
    %v1533 = vpack.c.b16 %v1411, %v1409
    %v1534 = vpack.c.b16 %v1414, %v1412
    %v1535 = vpack.c.b16 %v1415, %v1413
    %v1536 = vpack.c.b16 %v1418, %v1416
    %v1537 = vpack.c.b16 %v1419, %v1417
    %v1538 = vpack.c.b16 %v1422, %v1420
    %v1539 = vpack.c.b16 %v1423, %v1421
    %v1540 = vpack.c.b16 %v1426, %v1424
    %v1541 = vpack.c.b16 %v1427, %v1425
    %v1542 = vpack.c.b16 %v1430, %v1428
    %v1543 = vpack.c.b16 %v1431, %v1429
    %v1544 = vpack.c.b16 %v1434, %v1432
    %v1545 = vpack.c.b16 %v1435, %v1433
    %v1546 = vpack.c.b16 %v1438, %v1436
    %v1547 = vpack.c.b16 %v1439, %v1437
    %v1548 = vpack.c.b16 %v1442, %v1440
    %v1549 = vpack.c.b16 %v1443, %v1441
    %v1550 = vpack.c.b16 %v1446, %v1444
    %v1551 = vpack.c.b16 %v1447, %v1445
    %v1552 = vpack.c.b16 %v1450, %v1448
    %v1553 = vpack.c.b16 %v1451, %v1449
    %v1554 = vpack.c.b16 %v1454, %v1452
    %v1555 = vpack.c.b16 %v1455, %v1453
    %v1556 = vpack.c.b16 %v1458, %v1456
    %v1557 = vpack.c.b16 %v1459, %v1457
    %v1558 = vpack.c.b16 %v1462, %v1460
    %v1559 = vpack.c.b16 %v1463, %v1461
    %v1560 = vpack.c.b16 %v1466, %v1464
    %v1561 = vpack.c.b16 %v1467, %v1465
    %v1562 = vpack.c.b16 %v1470, %v1468
    %v1563 = vpack.c.b16 %v1471, %v1469
    %v1564 = vpack.c.b16 %v1474, %v1472
    %v1565 = vpack.c.b16 %v1475, %v1473
    %v1566 = vpack.c.b16 %v1478, %v1476
    %v1567 = vpack.c.b16 %v1479, %v1477
    %v1568 = vpack.c.b16 %v1482, %v1480
    %v1569 = vpack.c.b16 %v1483, %v1481
    %v1570 = vpack.c.b16 %v1486, %v1484
    %v1571 = vpack.c.b16 %v1487, %v1485
    %v1572 = vpack.c.b16 %v1490, %v1488
    %v1573 = vpack.c.b16 %v1491, %v1489
    %v1574 = vpack.c.b16 %v1494, %v1492
    %v1575 = vpack.c.b16 %v1495, %v1493
    %v1576 = vpack.c.b16 %v1498, %v1496
    %v1577 = vpack.c.b16 %v1499, %v1497
    %v1578 = vpack.c.b16 %v1502, %v1500
    %v1579 = vpack.c.b16 %v1503, %v1501
    %v1580 = vpack.c.b16 %v1506, %v1504
    %v1581 = vpack.c.b16 %v1507, %v1505
    %v1582 = vpack.c.b16 %v1510, %v1508
    %v1583 = vpack.c.b16 %v1511, %v1509
    %v1584 = vpack.c.b16 %v1514, %v1512
    %v1585 = vpack.c.b16 %v1515, %v1513
    %v1586 = vpack.c.b16 %v1518, %v1516
    %v1587 = vpack.c.b16 %v1519, %v1517
    %v1588 = vpack.c.b16 %v1522, %v1520
    %v1589 = vpack.c.b16 %v1523, %v1521
    %v1590 = vpack.c.b16 %v1526, %v1524
    %v1591 = vpack.c.b16 %v1527, %v1525
    %1656 = vmatprep.subr.bf16.mxu0 %v1529
    %1657 = vmatpush1.bf16.msra.mxu0 %v1528
    %1658 = vmatprep.subr.bf16.mxu0 %v1531
    %1659 = vmatpush1.bf16.msra.mxu0 %v1530
    %1660 = vmatprep.subr.bf16.mxu0 %v1533
    %1661 = vmatpush1.bf16.msra.mxu0 %v1532
    %1662 = vmatprep.subr.bf16.mxu0 %v1535
    %1663 = vmatpush1.bf16.msra.mxu0 %v1534
    %1664 = vmatprep.subr.bf16.mxu0 %v1537
    %1665 = vmatpush1.bf16.msra.mxu0 %v1536
    %1666 = vmatprep.subr.bf16.mxu0 %v1539
    %1667 = vmatpush1.bf16.msra.mxu0 %v1538
    %1668 = vmatprep.subr.bf16.mxu0 %v1541
    %1669 = vmatpush1.bf16.msra.mxu0 %v1540
    %1670 = vmatprep.subr.bf16.mxu0 %v1543
    %1671 = vmatpush1.bf16.msra.mxu0 %v1542
    %1672 = vmatprep.subr.bf16.mxu0 %v1545
    %1673 = vmatpush1.bf16.msra.mxu0 %v1544
    %1674 = vmatprep.subr.bf16.mxu0 %v1547
    %1675 = vmatpush1.bf16.msra.mxu0 %v1546
    %1676 = vmatprep.subr.bf16.mxu0 %v1549
    %1677 = vmatpush1.bf16.msra.mxu0 %v1548
    %1678 = vmatprep.subr.bf16.mxu0 %v1551
    %1679 = vmatpush1.bf16.msra.mxu0 %v1550
    %1680 = vmatprep.subr.bf16.mxu0 %v1553
    %1681 = vmatpush1.bf16.msra.mxu0 %v1552
    %1682 = vmatprep.subr.bf16.mxu0 %v1555
    %1683 = vmatpush1.bf16.msra.mxu0 %v1554
    %1684 = vmatprep.subr.bf16.mxu0 %v1557
    %1685 = vmatpush1.bf16.msra.mxu0 %v1556
    %1686 = vmatprep.subr.bf16.mxu0 %v1559
    %1687 = vmatpush1.bf16.msra.mxu0 %v1558
    %1688 = vmatprep.mubr.bf16.mxu0 %v1256
    %1689 = vmatmul.mubr.bf16.gmra.mrb[0].mxu0 %v1255
    %v1690 = vpop.f32.mrb[0].mxu0
    %v1691 = vadd.f32 %v1329, %v1690
    %v1692 = vpop.f32.mrb[0].mxu0
    %v1693 = vadd.f32 %v1333, %v1692
    %v1694 = vpop.f32.mrb[0].mxu0
    %v1695 = vpop.f32.mrb[0].mxu0
    %1696 = vdwg.mxu0
    %1697 = vmatprep.subr.bf16.mxu0 %v1561
    %1698 = vmatpush1.bf16.msra.mxu0 %v1560
    %1699 = vmatprep.subr.bf16.mxu0 %v1563
    %1700 = vmatpush1.bf16.msra.mxu0 %v1562
    %1701 = vmatprep.subr.bf16.mxu0 %v1565
    %1702 = vmatpush1.bf16.msra.mxu0 %v1564
    %1703 = vmatprep.subr.bf16.mxu0 %v1567
    %1704 = vmatpush1.bf16.msra.mxu0 %v1566
    %1705 = vmatprep.subr.bf16.mxu0 %v1569
    %1706 = vmatpush1.bf16.msra.mxu0 %v1568
    %1707 = vmatprep.subr.bf16.mxu0 %v1571
    %1708 = vmatpush1.bf16.msra.mxu0 %v1570
    %1709 = vmatprep.subr.bf16.mxu0 %v1573
    %1710 = vmatpush1.bf16.msra.mxu0 %v1572
    %1711 = vmatprep.subr.bf16.mxu0 %v1575
    %1712 = vmatpush1.bf16.msra.mxu0 %v1574
    %1713 = vmatprep.subr.bf16.mxu0 %v1577
    %1714 = vmatpush1.bf16.msra.mxu0 %v1576
    %1715 = vmatprep.subr.bf16.mxu0 %v1579
    %1716 = vmatpush1.bf16.msra.mxu0 %v1578
    %1717 = vmatprep.subr.bf16.mxu0 %v1581
    %1718 = vmatpush1.bf16.msra.mxu0 %v1580
    %1719 = vmatprep.subr.bf16.mxu0 %v1583
    %1720 = vmatpush1.bf16.msra.mxu0 %v1582
    %1721 = vmatprep.subr.bf16.mxu0 %v1585
    %1722 = vmatpush1.bf16.msra.mxu0 %v1584
    %1723 = vmatprep.subr.bf16.mxu0 %v1587
    %1724 = vmatpush1.bf16.msra.mxu0 %v1586
    %1725 = vmatprep.subr.bf16.mxu0 %v1589
    %1726 = vmatpush1.bf16.msra.mxu0 %v1588
    %1727 = vmatprep.subr.bf16.mxu0 %v1591
    %1728 = vmatpush1.bf16.msra.mxu0 %v1590
    %1729 = vmatprep.mubr.bf16.mxu0 %v1258
    %1730 = vmatmul.mubr.bf16.gmra.mrb[0].mxu0 %v1257
    %v1731 = vpop.f32.mrb[0].mxu0
    %v1732 = vadd.f32 %v1691, %v1731
    %v1733 = vpop.f32.mrb[0].mxu0
    %v1734 = vadd.f32 %v1693, %v1733
    %v1735 = vpop.f32.mrb[0].mxu0
    %v1736 = vpop.f32.mrb[0].mxu0
    %1737 = vdwg.mxu0
    %v1738 = vmax.f32 %v1732, 0.0
    %v1739 = vmax.f32 %v1734, 0.0
    %v1740 = vpack.c.bf16 %v1738, %v1738
    %v1741 = vpack.c.bf16 %v1739, %v1739
    %v1742 = vld [vmem:[#allocation16] sm:$0xff]
    %v1743 = vld [vmem:[#allocation16 + $0x8] sm:$0xff]
    %v1744 = vld [vmem:[#allocation16 + $0x10] sm:$0xff]
    %v1745 = vld [vmem:[#allocation16 + $0x18] sm:$0xff]
    %v1746 = vld [vmem:[#allocation16 + $0x20] sm:$0xff]
    %v1747 = vld [vmem:[#allocation16 + $0x28] sm:$0xff]
    %v1748 = vld [vmem:[#allocation16 + $0x30] sm:$0xff]
    %v1749 = vld [vmem:[#allocation16 + $0x38] sm:$0xff]
    %v1750 = vld [vmem:[#allocation16 + $0x40] sm:$0xff]
    %v1751 = vld [vmem:[#allocation16 + $0x48] sm:$0xff]
    %v1752 = vld [vmem:[#allocation16 + $0x50] sm:$0xff]
    %v1753 = vld [vmem:[#allocation16 + $0x58] sm:$0xff]
    %v1754 = vld [vmem:[#allocation16 + $0x60] sm:$0xff]
    %v1755 = vld [vmem:[#allocation16 + $0x68] sm:$0xff]
    %v1756 = vld [vmem:[#allocation16 + $0x70] sm:$0xff]
    %v1757 = vld [vmem:[#allocation16 + $0x78] sm:$0xff]
    %v1758 = vld [vmem:[#allocation16 + $0x80] sm:$0xff]
    %v1759 = vld [vmem:[#allocation16 + $0x88] sm:$0xff]
    %v1760 = vld [vmem:[#allocation16 + $0x90] sm:$0xff]
    %v1761 = vld [vmem:[#allocation16 + $0x98] sm:$0xff]
    %v1762 = vld [vmem:[#allocation16 + $0xa0] sm:$0xff]
    %v1763 = vld [vmem:[#allocation16 + $0xa8] sm:$0xff]
    %v1764 = vld [vmem:[#allocation16 + $0xb0] sm:$0xff]
    %v1765 = vld [vmem:[#allocation16 + $0xb8] sm:$0xff]
    %v1766 = vld [vmem:[#allocation16 + $0xc0] sm:$0xff]
    %v1767 = vld [vmem:[#allocation16 + $0xc8] sm:$0xff]
    %v1768 = vld [vmem:[#allocation16 + $0xd0] sm:$0xff]
    %v1769 = vld [vmem:[#allocation16 + $0xd8] sm:$0xff]
    %v1770 = vld [vmem:[#allocation16 + $0xe0] sm:$0xff]
    %v1771 = vld [vmem:[#allocation16 + $0xe8] sm:$0xff]
    %v1772 = vld [vmem:[#allocation16 + $0xf0] sm:$0xff]
    %v1773 = vld [vmem:[#allocation16 + $0xf8] sm:$0xff]
    %s1774 = scalar_lea.vmem %s10, 2
    %v1775 = vld [vmem:[%s1774] ss:$4 sm:$0x3]
    %v1777 = vlaneseq
    %v1778 = vshrl.u32 %v1777, 7
    %v1779 = vsub.s32 0, %v1778
    %v1780 = vrot.slane %v1775, %v1779
    %v1781 = vlaneseq
    %v1782 = vshrl.u32 %v1781, 7
    %v1783 = vsub.s32 1, %v1782
    %v1784 = vrot.slane %v1775, %v1783
    %v1819 = vunpack.c.l.b16 %v1742
    %v1820 = vunpack.c.h.b16 %v1742
    %v1821 = vunpack.c.l.b16 %v1743
    %v1822 = vunpack.c.h.b16 %v1743
    %v1823 = vunpack.c.l.b16 %v1744
    %v1824 = vunpack.c.h.b16 %v1744
    %v1825 = vunpack.c.l.b16 %v1745
    %v1826 = vunpack.c.h.b16 %v1745
    %v1827 = vunpack.c.l.b16 %v1746
    %v1828 = vunpack.c.h.b16 %v1746
    %v1829 = vunpack.c.l.b16 %v1747
    %v1830 = vunpack.c.h.b16 %v1747
    %v1831 = vunpack.c.l.b16 %v1748
    %v1832 = vunpack.c.h.b16 %v1748
    %v1833 = vunpack.c.l.b16 %v1749
    %v1834 = vunpack.c.h.b16 %v1749
    %v1835 = vunpack.c.l.b16 %v1750
    %v1836 = vunpack.c.h.b16 %v1750
    %v1837 = vunpack.c.l.b16 %v1751
    %v1838 = vunpack.c.h.b16 %v1751
    %v1839 = vunpack.c.l.b16 %v1752
    %v1840 = vunpack.c.h.b16 %v1752
    %v1841 = vunpack.c.l.b16 %v1753
    %v1842 = vunpack.c.h.b16 %v1753
    %v1843 = vunpack.c.l.b16 %v1754
    %v1844 = vunpack.c.h.b16 %v1754
    %v1845 = vunpack.c.l.b16 %v1755
    %v1846 = vunpack.c.h.b16 %v1755
    %v1847 = vunpack.c.l.b16 %v1756
    %v1848 = vunpack.c.h.b16 %v1756
    %v1849 = vunpack.c.l.b16 %v1757
    %v1850 = vunpack.c.h.b16 %v1757
    %v1851 = vunpack.c.l.b16 %v1758
    %v1852 = vunpack.c.h.b16 %v1758
    %v1853 = vunpack.c.l.b16 %v1759
    %v1854 = vunpack.c.h.b16 %v1759
    %v1855 = vunpack.c.l.b16 %v1760
    %v1856 = vunpack.c.h.b16 %v1760
    %v1857 = vunpack.c.l.b16 %v1761
    %v1858 = vunpack.c.h.b16 %v1761
    %v1859 = vunpack.c.l.b16 %v1762
    %v1860 = vunpack.c.h.b16 %v1762
    %v1861 = vunpack.c.l.b16 %v1763
    %v1862 = vunpack.c.h.b16 %v1763
    %v1863 = vunpack.c.l.b16 %v1764
    %v1864 = vunpack.c.h.b16 %v1764
    %v1865 = vunpack.c.l.b16 %v1765
    %v1866 = vunpack.c.h.b16 %v1765
    %v1867 = vunpack.c.l.b16 %v1766
    %v1868 = vunpack.c.h.b16 %v1766
    %v1869 = vunpack.c.l.b16 %v1767
    %v1870 = vunpack.c.h.b16 %v1767
    %v1871 = vunpack.c.l.b16 %v1768
    %v1872 = vunpack.c.h.b16 %v1768
    %v1873 = vunpack.c.l.b16 %v1769
    %v1874 = vunpack.c.h.b16 %v1769
    %v1875 = vunpack.c.l.b16 %v1770
    %v1876 = vunpack.c.h.b16 %v1770
    %v1877 = vunpack.c.l.b16 %v1771
    %v1878 = vunpack.c.h.b16 %v1771
    %v1879 = vunpack.c.l.b16 %v1772
    %v1880 = vunpack.c.h.b16 %v1772
    %v1881 = vunpack.c.l.b16 %v1773
    %v1882 = vunpack.c.h.b16 %v1773
    %v1883 = vpack.c.b16 %v1821, %v1819
    %v1884 = vpack.c.b16 %v1822, %v1820
    %v1885 = vpack.c.b16 %v1825, %v1823
    %v1886 = vpack.c.b16 %v1826, %v1824
    %v1887 = vpack.c.b16 %v1829, %v1827
    %v1888 = vpack.c.b16 %v1830, %v1828
    %v1889 = vpack.c.b16 %v1833, %v1831
    %v1890 = vpack.c.b16 %v1834, %v1832
    %v1891 = vpack.c.b16 %v1837, %v1835
    %v1892 = vpack.c.b16 %v1838, %v1836
    %v1893 = vpack.c.b16 %v1841, %v1839
    %v1894 = vpack.c.b16 %v1842, %v1840
    %v1895 = vpack.c.b16 %v1845, %v1843
    %v1896 = vpack.c.b16 %v1846, %v1844
    %v1897 = vpack.c.b16 %v1849, %v1847
    %v1898 = vpack.c.b16 %v1850, %v1848
    %v1899 = vpack.c.b16 %v1853, %v1851
    %v1900 = vpack.c.b16 %v1854, %v1852
    %v1901 = vpack.c.b16 %v1857, %v1855
    %v1902 = vpack.c.b16 %v1858, %v1856
    %v1903 = vpack.c.b16 %v1861, %v1859
    %v1904 = vpack.c.b16 %v1862, %v1860
    %v1905 = vpack.c.b16 %v1865, %v1863
    %v1906 = vpack.c.b16 %v1866, %v1864
    %v1907 = vpack.c.b16 %v1869, %v1867
    %v1908 = vpack.c.b16 %v1870, %v1868
    %v1909 = vpack.c.b16 %v1873, %v1871
    %v1910 = vpack.c.b16 %v1874, %v1872
    %v1911 = vpack.c.b16 %v1877, %v1875
    %v1912 = vpack.c.b16 %v1878, %v1876
    %v1913 = vpack.c.b16 %v1881, %v1879
    %v1914 = vpack.c.b16 %v1882, %v1880
    %1947 = vmatprep.subr.bf16.mxu0 %v1884
    %1948 = vmatpush1.bf16.msra.mxu0 %v1883
    %1949 = vmatprep.subr.bf16.mxu0 %v1886
    %1950 = vmatpush1.bf16.msra.mxu0 %v1885
    %1951 = vmatprep.subr.bf16.mxu0 %v1888
    %1952 = vmatpush1.bf16.msra.mxu0 %v1887
    %1953 = vmatprep.subr.bf16.mxu0 %v1890
    %1954 = vmatpush1.bf16.msra.mxu0 %v1889
    %1955 = vmatprep.subr.bf16.mxu0 %v1892
    %1956 = vmatpush1.bf16.msra.mxu0 %v1891
    %1957 = vmatprep.subr.bf16.mxu0 %v1894
    %1958 = vmatpush1.bf16.msra.mxu0 %v1893
    %1959 = vmatprep.subr.bf16.mxu0 %v1896
    %1960 = vmatpush1.bf16.msra.mxu0 %v1895
    %1961 = vmatprep.subr.bf16.mxu0 %v1898
    %1962 = vmatpush1.bf16.msra.mxu0 %v1897
    %1963 = vmatprep.subr.bf16.mxu0 %v1900
    %1964 = vmatpush1.bf16.msra.mxu0 %v1899
    %1965 = vmatprep.subr.bf16.mxu0 %v1902
    %1966 = vmatpush1.bf16.msra.mxu0 %v1901
    %1967 = vmatprep.subr.bf16.mxu0 %v1904
    %1968 = vmatpush1.bf16.msra.mxu0 %v1903
    %1969 = vmatprep.subr.bf16.mxu0 %v1906
    %1970 = vmatpush1.bf16.msra.mxu0 %v1905
    %1971 = vmatprep.subr.bf16.mxu0 %v1908
    %1972 = vmatpush1.bf16.msra.mxu0 %v1907
    %1973 = vmatprep.subr.bf16.mxu0 %v1910
    %1974 = vmatpush1.bf16.msra.mxu0 %v1909
    %1975 = vmatprep.subr.bf16.mxu0 %v1912
    %1976 = vmatpush1.bf16.msra.mxu0 %v1911
    %1977 = vmatprep.subr.bf16.mxu0 %v1914
    %1978 = vmatpush1.bf16.msra.mxu0 %v1913
    %1979 = vmatprep.mubr.bf16.mxu0 %v1741
    %1980 = vmatmul.mubr.bf16.gmra.mrb[0].mxu0 %v1740
    %v1981 = vpop.f32.mrb[0].mxu0
    %v1982 = vadd.f32 %v1780, %v1981
    %v1983 = vpop.f32.mrb[0].mxu0
    %v1984 = vadd.f32 %v1784, %v1983
    %v1985 = vpop.f32.mrb[0].mxu0
    %v1986 = vpop.f32.mrb[0].mxu0
    %1987 = vdwg.mxu0
    %v1988 = vmax.f32 %v1982, 0.0
    %v1989 = vmax.f32 %v1984, 0.0
    %v1990 = vpack.c.bf16 %v1988, %v1988
    %v1991 = vpack.c.bf16 %v1989, %v1989
    %v1992 = vld [vmem:[#allocation17] sm:$0xf]
    %v1993 = vld [vmem:[#allocation17 + $0x4] sm:$0xf]
    %v1994 = vld [vmem:[#allocation17 + $0x8] sm:$0xf]
    %v1995 = vld [vmem:[#allocation17 + $0xc] sm:$0xf]
    %v1996 = vld [vmem:[#allocation17 + $0x10] sm:$0xf]
    %v1997 = vld [vmem:[#allocation17 + $0x14] sm:$0xf]
    %v1998 = vld [vmem:[#allocation17 + $0x18] sm:$0xf]
    %v1999 = vld [vmem:[#allocation17 + $0x1c] sm:$0xf]
    %v2000 = vld [vmem:[#allocation17 + $0x20] sm:$0xf]
    %v2001 = vld [vmem:[#allocation17 + $0x24] sm:$0xf]
    %v2002 = vld [vmem:[#allocation17 + $0x28] sm:$0xf]
    %v2003 = vld [vmem:[#allocation17 + $0x2c] sm:$0xf]
    %v2004 = vld [vmem:[#allocation17 + $0x30] sm:$0xf]
    %v2005 = vld [vmem:[#allocation17 + $0x34] sm:$0xf]
    %v2006 = vld [vmem:[#allocation17 + $0x38] sm:$0xf]
    %v2007 = vld [vmem:[#allocation17 + $0x3c] sm:$0xf]
    %v2008 = vld [vmem:[#allocation17 + $0x40] sm:$0xf]
    %v2009 = vld [vmem:[#allocation17 + $0x44] sm:$0xf]
    %v2010 = vld [vmem:[#allocation17 + $0x48] sm:$0xf]
    %v2011 = vld [vmem:[#allocation17 + $0x4c] sm:$0xf]
    %v2012 = vld [vmem:[#allocation17 + $0x50] sm:$0xf]
    %v2013 = vld [vmem:[#allocation17 + $0x54] sm:$0xf]
    %v2014 = vld [vmem:[#allocation17 + $0x58] sm:$0xf]
    %v2015 = vld [vmem:[#allocation17 + $0x5c] sm:$0xf]
    %v2016 = vld [vmem:[#allocation17 + $0x60] sm:$0xf]
    %v2017 = vld [vmem:[#allocation17 + $0x64] sm:$0xf]
    %v2018 = vld [vmem:[#allocation17 + $0x68] sm:$0xf]
    %v2019 = vld [vmem:[#allocation17 + $0x6c] sm:$0xf]
    %v2020 = vld [vmem:[#allocation17 + $0x70] sm:$0xf]
    %v2021 = vld [vmem:[#allocation17 + $0x74] sm:$0xf]
    %v2022 = vld [vmem:[#allocation17 + $0x78] sm:$0xf]
    %v2023 = vld [vmem:[#allocation17 + $0x7c] sm:$0xf]
    %v2024 = vld [vmem:[%s10 + $0x3] sm:$0x1]
    %v2025 = vlaneseq
    %v2026 = vshrl.u32 %v2025, 7
    %v2027 = vsub.s32 0, %v2026
    %v2028 = vrot.slane %v2024, %v2027
    %v2061 = vunpack.c.l.b16 %v1992
    %v2062 = vunpack.c.l.b16 %v1993
    %v2063 = vunpack.c.l.b16 %v1994
    %v2064 = vunpack.c.l.b16 %v1995
    %v2065 = vunpack.c.l.b16 %v1996
    %v2066 = vunpack.c.l.b16 %v1997
    %v2067 = vunpack.c.l.b16 %v1998
    %v2068 = vunpack.c.l.b16 %v1999
    %v2069 = vunpack.c.l.b16 %v2000
    %v2070 = vunpack.c.l.b16 %v2001
    %v2071 = vunpack.c.l.b16 %v2002
    %v2072 = vunpack.c.l.b16 %v2003
    %v2073 = vunpack.c.l.b16 %v2004
    %v2074 = vunpack.c.l.b16 %v2005
    %v2075 = vunpack.c.l.b16 %v2006
    %v2076 = vunpack.c.l.b16 %v2007
    %v2077 = vunpack.c.l.b16 %v2008
    %v2078 = vunpack.c.l.b16 %v2009
    %v2079 = vunpack.c.l.b16 %v2010
    %v2080 = vunpack.c.l.b16 %v2011
    %v2081 = vunpack.c.l.b16 %v2012
    %v2082 = vunpack.c.l.b16 %v2013
    %v2083 = vunpack.c.l.b16 %v2014
    %v2084 = vunpack.c.l.b16 %v2015
    %v2085 = vunpack.c.l.b16 %v2016
    %v2086 = vunpack.c.l.b16 %v2017
    %v2087 = vunpack.c.l.b16 %v2018
    %v2088 = vunpack.c.l.b16 %v2019
    %v2089 = vunpack.c.l.b16 %v2020
    %v2090 = vunpack.c.l.b16 %v2021
    %v2091 = vunpack.c.l.b16 %v2022
    %v2092 = vunpack.c.l.b16 %v2023
    %v2093 = vpack.c.b16 %v2062, %v2061
    %v2094 = vpack.c.b16 %v2064, %v2063
    %v2095 = vpack.c.b16 %v2066, %v2065
    %v2096 = vpack.c.b16 %v2068, %v2067
    %v2097 = vpack.c.b16 %v2070, %v2069
    %v2098 = vpack.c.b16 %v2072, %v2071
    %v2099 = vpack.c.b16 %v2074, %v2073
    %v2100 = vpack.c.b16 %v2076, %v2075
    %v2101 = vpack.c.b16 %v2078, %v2077
    %v2102 = vpack.c.b16 %v2080, %v2079
    %v2103 = vpack.c.b16 %v2082, %v2081
    %v2104 = vpack.c.b16 %v2084, %v2083
    %v2105 = vpack.c.b16 %v2086, %v2085
    %v2106 = vpack.c.b16 %v2088, %v2087
    %v2107 = vpack.c.b16 %v2090, %v2089
    %v2108 = vpack.c.b16 %v2092, %v2091
    %2125 = vmatprep.subr.bf16.mxu0 0
    %2126 = vmatpush1.bf16.msra.mxu0 %v2093
    %2127 = vmatprep.subr.bf16.mxu0 0
    %2128 = vmatpush1.bf16.msra.mxu0 %v2094
    %2129 = vmatprep.subr.bf16.mxu0 0
    %2130 = vmatpush1.bf16.msra.mxu0 %v2095
    %2131 = vmatprep.subr.bf16.mxu0 0
    %2132 = vmatpush1.bf16.msra.mxu0 %v2096
    %2133 = vmatprep.subr.bf16.mxu0 0
    %2134 = vmatpush1.bf16.msra.mxu0 %v2097
    %2135 = vmatprep.subr.bf16.mxu0 0
    %2136 = vmatpush1.bf16.msra.mxu0 %v2098
    %2137 = vmatprep.subr.bf16.mxu0 0
    %2138 = vmatpush1.bf16.msra.mxu0 %v2099
    %2139 = vmatprep.subr.bf16.mxu0 0
    %2140 = vmatpush1.bf16.msra.mxu0 %v2100
    %2141 = vmatprep.subr.bf16.mxu0 0
    %2142 = vmatpush1.bf16.msra.mxu0 %v2101
    %2143 = vmatprep.subr.bf16.mxu0 0
    %2144 = vmatpush1.bf16.msra.mxu0 %v2102
    %2145 = vmatprep.subr.bf16.mxu0 0
    %2146 = vmatpush1.bf16.msra.mxu0 %v2103
    %2147 = vmatprep.subr.bf16.mxu0 0
    %2148 = vmatpush1.bf16.msra.mxu0 %v2104
    %2149 = vmatprep.subr.bf16.mxu0 0
    %2150 = vmatpush1.bf16.msra.mxu0 %v2105
    %2151 = vmatprep.subr.bf16.mxu0 0
    %2152 = vmatpush1.bf16.msra.mxu0 %v2106
    %2153 = vmatprep.subr.bf16.mxu0 0
    %2154 = vmatpush1.bf16.msra.mxu0 %v2107
    %2155 = vmatprep.subr.bf16.mxu0 0
    %2156 = vmatpush1.bf16.msra.mxu0 %v2108
    %2157 = vmatprep.mubr.bf16.mxu0 %v1991
    %2158 = vmatmul.mubr.bf16.gmra.mrb[0].mxu0 %v1990
    %v2159 = vpop.f32.mrb[0].mxu0
    %v2160 = vadd.f32 %v2028, %v2159
    %v2161 = vpop.f32.mrb[0].mxu0
    %v2162 = vpop.f32.mrb[0].mxu0
    %v2163 = vpop.f32.mrb[0].mxu0
    %2164 = vdwg.mxu0
    %2165 = vst [vmem:[#allocation19] sm:$0xff] %v2160
    // Predicated region
    $region86: #{dti_forward.1} parent=1 // pred_check
      _
    $region87: #{dti_forward.1} parent=1 // pred_check_branch
      %2167 = sbr.rel (0) target = $region89
    $region88: #{dti_forward.1} parent=1 // pred_region
      %s2169 = ssub.s32 128, 128
      %2170 = vsyncadd [#allocation4], %s2169
      %s2172 = sshll.u32 [#allocation19], 4
      %s2173 = int_to_ptr.vmem [resolvable:$true] %s2172
      %2175 = dma.vmem_to_hbm [thread:$0]  %s2173, 128, %s11, [#allocation4]
    $region89: #{dti_forward.1} parent=1 // pred_fallthru
      _
    // Predicated region
    $region90: #{dti_forward.1} parent=1 // pred_check
      _
    $region91: #{dti_forward.1} parent=1 // pred_check_branch
      %2177 = sbr.rel (0) target = $region93
    $region92: #{dti_forward.1} parent=1 // pred_region
      %2178 = dma.done [#allocation4], 128
    $region93: #{dti_forward.1} parent=1 // pred_fallthru
      _
    %2179 = vsyncpa [#allocation3], 1
    %2180 = vsyncpa [#allocation6], 1
    %2181 = vsyncpa [#allocation9], 1
    %2182 = vsyncpa [#allocation12], 1
    %2183 = vsyncpa [#allocation15], 1
    %2184 = vsyncpa [#allocation18], 1
    %2185 = vsyncpa [#allocation4], 1

</llo_original>
